<compile_context>
chip_gen: v5e
topology: v5e:2x2
jax: 0.10.0
libtpu: 0.0.40
codegen_flags: <defaults>
</compile_context>

<pallas_src>
import jax
import jax.numpy as jnp
import numpy as np
from jax import lax
from jax.experimental import pallas as pl
from jax.experimental.pallas import tpu as pltpu


# ---------------------------------------------------------------------------
# Pallas kernel (fused LSTM recurrence + classifier head)
# ---------------------------------------------------------------------------
def lstm_fused_kernel(x_ref, wih_ref, whh_ref, b_ref, xt_ref,
                      w1h_ref, w1x_ref, b1_ref, w2row_ref, b2_ref,
                      out_ref, gx_ref):
    """x_ref: (T*Bp, I) time-major flattened (row = t*Bp + b).

    wih_ref: (I, 4H), whh_ref: (H, 4H), b_ref: (1, 4H)  -- concatenated gates
    (PyTorch order [i, f, g, o]).  gx_ref: VMEM scratch (T*Bp, 4H) holding the
    hoisted input projections + bias.  w2row_ref: (1, 32) row form of the final
    Linear(32, 1) weight so the head finishes with a lane reduction.
    """
    Bp = xt_ref.shape[0]
    T = x_ref.shape[0] // Bp
    H4 = whh_ref.shape[-1]
    H = H4 // 4

    # ---- prologue: hoisted input projection, one lane-dense matmul ---------
    gx_ref[...] = (
        jnp.dot(x_ref[...], wih_ref[...], preferred_element_type=jnp.float32)
        + b_ref[...])                                   # (T*Bp, 4H)

    # ---- serial recurrence: one (Bp,H)@(H,4H) MXU issue per step -----------
    def step(t, carry):
        h, c = carry
        row = pl.multiple_of(t * Bp, Bp)
        gates = gx_ref[pl.ds(row, Bp), :] + jnp.dot(
            h, whh_ref[...], preferred_element_type=jnp.float32)  # (Bp, 4H)
        i_g = jax.nn.sigmoid(gates[:, 0 * H:1 * H])
        f_g = jax.nn.sigmoid(gates[:, 1 * H:2 * H])
        g_g = jnp.tanh(gates[:, 2 * H:3 * H])
        o_g = jax.nn.sigmoid(gates[:, 3 * H:4 * H])
        c_new = f_g * c + i_g * g_g
        h_new = o_g * jnp.tanh(c_new)
        return (h_new, c_new)

    h0 = jnp.zeros((Bp, H), jnp.float32)
    c0 = jnp.zeros((Bp, H), jnp.float32)
    h_n, _ = lax.fori_loop(0, T, step, (h0, c0), unroll=min(T, 8))

    # ---- fused classifier head (dropouts are identity in eval mode) --------
    # concat((h, x_today)) @ W1 decomposed as h @ W1[:H] + x_today * W1[H:]
    z1 = (jnp.dot(h_n, w1h_ref[...], preferred_element_type=jnp.float32)
          + xt_ref[...] * w1x_ref[...]          # (Bp,1)*(1,32) -> (Bp,32)
          + b1_ref[...])
    a1 = jnp.maximum(z1, 0.0)                    # ReLU
    # Linear(32, 1) as a lane reduction (avoids a degenerate N=1 MXU matmul).
    out_ref[...] = (jnp.sum(a1 * w2row_ref[...], axis=-1, keepdims=True)
                    + b2_ref[...])


# ---------------------------------------------------------------------------
# Wrapper
# ---------------------------------------------------------------------------
def _vmem_budget_bytes(T, Bp, I, H):
    """Rough VMEM bound for the all-resident design (shapes are static)."""
    lane = 128
    rows = T * Bp
    x_bytes = rows * max(I, lane) * 4            # x slab (lane-padded)
    gx_bytes = rows * max(4 * H, lane) * 4       # hoisted projection scratch
    w_bytes = (max(I, 8) + H + 8) * max(4 * H, lane) * 4
    est = 2 * (x_bytes + gx_bytes) + w_bytes + (1 << 20)
    return int(min(max(est, 16 * 2**20), 64 * 2**20))


@jax.jit
def lstm_forward(x_prev, x_today, params):
    """x_prev: (B, T, I) batch_first, x_today: (B,). Returns (B, 1)."""
    B, T, I = x_prev.shape
    H = params["whh_t"].shape[0]                 # whh_t is (H, 4H)
    Bp = ((B + 7) // 8) * 8                      # pad batch to sublane multiple

    x_pad = jnp.pad(x_prev.astype(jnp.float32),
                    ((0, Bp - B), (0, 0), (0, 0)))
    xt_pad = jnp.pad(x_today.astype(jnp.float32).reshape(B, 1),
                     ((0, Bp - B), (0, 0)))

    # Time-major flatten: row index = t * Bp + b.
    x2d = jnp.transpose(x_pad, (1, 0, 2)).reshape(T * Bp, I)

    # Concatenated-gate operands passed directly (no per-call slicing/stacking).
    bias = (params["b_ih"] + params["b_hh"]).reshape(1, 4 * H)
    w2_row = params["w2"].reshape(1, -1)         # (32,1) -> (1,32)

    out_pad = pl.pallas_call(
        lstm_fused_kernel,
        out_shape=jax.ShapeDtypeStruct((Bp, 1), jnp.float32),
        scratch_shapes=[pltpu.VMEM((T * Bp, 4 * H), jnp.float32)],
        compiler_params=pltpu.CompilerParams(
            vmem_limit_bytes=_vmem_budget_bytes(T, Bp, I, H)),
    )(x2d, params["wih_t"], params["whh_t"], bias, xt_pad,
      params["w1h"], params["w1x"], params["b1"].reshape(1, -1),
      w2_row, params["b2"].reshape(1, -1))

    return out_pad[:B]


# ---------------------------------------------------------------------------
# Pure-JAX reference (matches PyTorch nn.LSTM + classifier, eval mode)
# ---------------------------------------------------------------------------
def lstm_reference(x_prev, x_today, params):
    B, T, I = x_prev.shape
    H = params["whh_t"].shape[0]
    wih_t = params["wih_t"]
    whh_t = params["whh_t"]
    bias = (params["b_ih"] + params["b_hh"]).reshape(1, 4 * H)

    def step(carry, x_t):
        h, c = carry
        gates = x_t @ wih_t + h @ whh_t + bias
        i_g = jax.nn.sigmoid(gates[:, 0 * H:1 * H])
        f_g = jax.nn.sigmoid(gates[:, 1 * H:2 * H])
        g_g = jnp.tanh(gates[:, 2 * H:3 * H])
        o_g = jax.nn.sigmoid(gates[:, 3 * H:4 * H])
        c = f_g * c + i_g * g_g
        h = o_g * jnp.tanh(c)
        return (h, c), None

    h0 = jnp.zeros((B, H), jnp.float32)
    c0 = jnp.zeros((B, H), jnp.float32)
    (h_n, _), _ = lax.scan(step, (h0, c0), jnp.transpose(x_prev, (1, 0, 2)))

    feat = jnp.concatenate([h_n, x_today.reshape(B, 1)], axis=1)
    w1 = jnp.concatenate([params["w1h"], params["w1x"]], axis=0)
    z1 = jnp.maximum(feat @ w1 + params["b1"], 0.0)
    return z1 @ params["w2"] + params["b2"]


def init_params(key, input_size=4, hidden_size=64):
    """Deterministic synthetic parameters (PyTorch-style uniform init)."""
    H, I = hidden_size, input_size
    k = 1.0 / np.sqrt(H)
    keys = jax.random.split(key, 8)
    u = lambda kk, shape: jax.random.uniform(kk, shape, jnp.float32, -k, k)
    w_ih = u(keys[0], (4 * H, I))     # PyTorch weight_ih_l0
    w_hh = u(keys[1], (4 * H, H))     # PyTorch weight_hh_l0
    b_ih = u(keys[2], (4 * H,))
    b_hh = u(keys[3], (4 * H,))
    w1 = u(keys[4], (H + 1, 32))      # Linear(H+1, 32) weight (transposed)
    b1 = u(keys[5], (32,))
    w2 = u(keys[6], (32, 1))          # Linear(32, 1) weight (transposed)
    b2 = u(keys[7], (1,))
    return {
        "wih_t": jnp.transpose(w_ih),   # (I, 4H)
        "whh_t": jnp.transpose(w_hh),   # (H, 4H)
        "b_ih": b_ih,
        "b_hh": b_hh,
        "w1h": w1[:H, :],               # (H, 32)
        "w1x": w1[H:, :],               # (1, 32)
        "b1": b1,
        "w2": w2,
        "b2": b2,
    }


if __name__ == "__main__":
    B, T, I, H = 2, 8, 4, 64

    key = jax.random.PRNGKey(0)
    k_p, k_x, k_t = jax.random.split(key, 3)
    params = init_params(k_p, input_size=I, hidden_size=H)

    x_prev = jax.random.normal(k_x, (B, T, I), jnp.float32)   # batch_first
    x_today = jax.random.normal(k_t, (B,), jnp.float32)

    out = lstm_forward(x_prev, x_today, params)
    out = jax.block_until_ready(out)

    ref = jax.block_until_ready(lstm_reference(x_prev, x_today, params))
    assert out.shape == (B, 1)
    np.testing.assert_allclose(np.asarray(out), np.asarray(ref),
                               rtol=1e-4, atol=1e-4)
    print("KERNEL_OK")
</pallas_src>

<mosaic_0001>
module attributes {stable_mosaic.version = 11 : i64} {
  func.func @lstm_fused_kernel(%arg0: memref<64x4xf32, #tpu.memory_space<vmem>>, %arg1: memref<4x256xf32, #tpu.memory_space<vmem>>, %arg2: memref<64x256xf32, #tpu.memory_space<vmem>>, %arg3: memref<1x256xf32, #tpu.memory_space<vmem>>, %arg4: memref<8x1xf32, #tpu.memory_space<vmem>>, %arg5: memref<64x32xf32, #tpu.memory_space<vmem>>, %arg6: memref<1x32xf32, #tpu.memory_space<vmem>>, %arg7: memref<1x32xf32, #tpu.memory_space<vmem>>, %arg8: memref<1x32xf32, #tpu.memory_space<vmem>>, %arg9: memref<1x1xf32, #tpu.memory_space<vmem>>, %arg10: memref<8x1xf32, #tpu.memory_space<vmem>>, %arg11: memref<64x256xf32, #tpu.memory_space<vmem>>) attributes {dimension_semantics = [], scalar_prefetch = 0 : i64, scratch_operands = 1 : i64, tpu.core_type = #tpu.core_type<tc>} {
    %c0 = arith.constant 0 : index
    %c0_0 = arith.constant 0 : index
    %0 = vector.load %arg0[%c0, %c0_0] : memref<64x4xf32, #tpu.memory_space<vmem>>, vector<64x4xf32>
    %c0_1 = arith.constant 0 : index
    %c0_2 = arith.constant 0 : index
    %1 = vector.load %arg1[%c0_1, %c0_2] : memref<4x256xf32, #tpu.memory_space<vmem>>, vector<4x256xf32>
    %cst = arith.constant dense<0.000000e+00> : vector<64x256xf32>
    %2 = tpu.matmul %0, %1, %cst {dimension_numbers = #tpu.dot_dimension_numbers<[1], [0], [0], [1], [0, 0, 1, 1], [], []>} : vector<64x4xf32>, vector<4x256xf32>, vector<64x256xf32> -> vector<64x256xf32>
    %c0_3 = arith.constant 0 : index
    %c0_4 = arith.constant 0 : index
    %3 = vector.load %arg3[%c0_3, %c0_4] : memref<1x256xf32, #tpu.memory_space<vmem>>, vector<1x256xf32>
    %4 = vector.broadcast %3 : vector<1x256xf32> to vector<64x256xf32>
    %5 = arith.addf %2, %4 : vector<64x256xf32>
    %c0_5 = arith.constant 0 : index
    %c0_6 = arith.constant 0 : index
    %6 = vector.load %arg11[%c0_5, %c0_6] : memref<64x256xf32, #tpu.memory_space<vmem>>, vector<64x256xf32>
    tpu.vector_store %arg11[%c0_5, %c0_6], %5 {strides = array<i32>} : memref<64x256xf32, #tpu.memory_space<vmem>>, vector<64x256xf32>,
    %cst_7 = arith.constant 0.000000e+00 : f32
    %7 = vector.broadcast %cst_7 : f32 to vector<8x64xf32>
    %cst_8 = arith.constant 0.000000e+00 : f32
    %8 = vector.broadcast %cst_8 : f32 to vector<8x64xf32>
    %c0_i32 = arith.constant 0 : i32
    %c8_i32 = arith.constant 8 : i32
    %9 = arith.muli %c0_i32, %c8_i32 : i32
    %10 = tpu.assume_multiple %9, 8 : i32
    %11 = arith.index_cast %10 : i32 to index
    %c0_9 = arith.constant 0 : index
    %12 = vector.load %arg11[%11, %c0_9] : memref<64x256xf32, #tpu.memory_space<vmem>>, vector<8x256xf32>
    %c0_10 = arith.constant 0 : index
    %c0_11 = arith.constant 0 : index
    %13 = vector.load %arg2[%c0_10, %c0_11] : memref<64x256xf32, #tpu.memory_space<vmem>>, vector<64x256xf32>
    %cst_12 = arith.constant dense<0.000000e+00> : vector<8x256xf32>
    %14 = tpu.matmul %7, %13, %cst_12 {dimension_numbers = #tpu.dot_dimension_numbers<[1], [0], [0], [1], [0, 0, 1, 1], [], []>} : vector<8x64xf32>, vector<64x256xf32>, vector<8x256xf32> -> vector<8x256xf32>
    %15 = arith.addf %12, %14 : vector<8x256xf32>
    %16 = vector.extract_strided_slice %15 {offsets = [0, 0], sizes = [8, 64], strides = [1, 1]} : vector<8x256xf32> to vector<8x64xf32>
    %17 = arith.negf %16 : vector<8x64xf32>
    %18 = math.exp %17 : vector<8x64xf32>
    %cst_13 = arith.constant 1.000000e+00 : f32
    %19 = vector.broadcast %cst_13 : f32 to vector<8x64xf32>
    %20 = arith.addf %19, %18 : vector<8x64xf32>
    %21 = arith.divf %19, %20 : vector<8x64xf32>
    %22 = vector.extract_strided_slice %15 {offsets = [0, 64], sizes = [8, 64], strides = [1, 1]} : vector<8x256xf32> to vector<8x64xf32>
    %23 = arith.negf %22 : vector<8x64xf32>
    %24 = math.exp %23 : vector<8x64xf32>
    %cst_14 = arith.constant 1.000000e+00 : f32
    %25 = vector.broadcast %cst_14 : f32 to vector<8x64xf32>
    %26 = arith.addf %25, %24 : vector<8x64xf32>
    %27 = arith.divf %25, %26 : vector<8x64xf32>
    %28 = vector.extract_strided_slice %15 {offsets = [0, 128], sizes = [8, 64], strides = [1, 1]} : vector<8x256xf32> to vector<8x64xf32>
    %29 = math.tanh %28 : vector<8x64xf32>
    %30 = vector.extract_strided_slice %15 {offsets = [0, 192], sizes = [8, 64], strides = [1, 1]} : vector<8x256xf32> to vector<8x64xf32>
    %31 = arith.negf %30 : vector<8x64xf32>
    %32 = math.exp %31 : vector<8x64xf32>
    %cst_15 = arith.constant 1.000000e+00 : f32
    %33 = vector.broadcast %cst_15 : f32 to vector<8x64xf32>
    %34 = arith.addf %33, %32 : vector<8x64xf32>
    %35 = arith.divf %33, %34 : vector<8x64xf32>
    %36 = arith.mulf %27, %8 : vector<8x64xf32>
    %37 = arith.mulf %21, %29 : vector<8x64xf32>
    %38 = arith.addf %36, %37 : vector<8x64xf32>
    %39 = math.tanh %38 : vector<8x64xf32>
    %40 = arith.mulf %35, %39 : vector<8x64xf32>
    %c1_i32 = arith.constant 1 : i32
    %c8_i32_16 = arith.constant 8 : i32
    %41 = arith.muli %c1_i32, %c8_i32_16 : i32
    %42 = tpu.assume_multiple %41, 8 : i32
    %43 = arith.index_cast %42 : i32 to index
    %c0_17 = arith.constant 0 : index
    %44 = vector.load %arg11[%43, %c0_17] : memref<64x256xf32, #tpu.memory_space<vmem>>, vector<8x256xf32>
    %c0_18 = arith.constant 0 : index
    %c0_19 = arith.constant 0 : index
    %45 = vector.load %arg2[%c0_18, %c0_19] : memref<64x256xf32, #tpu.memory_space<vmem>>, vector<64x256xf32>
    %cst_20 = arith.constant dense<0.000000e+00> : vector<8x256xf32>
    %46 = tpu.matmul %40, %45, %cst_20 {dimension_numbers = #tpu.dot_dimension_numbers<[1], [0], [0], [1], [0, 0, 1, 1], [], []>} : vector<8x64xf32>, vector<64x256xf32>, vector<8x256xf32> -> vector<8x256xf32>
    %47 = arith.addf %44, %46 : vector<8x256xf32>
    %48 = vector.extract_strided_slice %47 {offsets = [0, 0], sizes = [8, 64], strides = [1, 1]} : vector<8x256xf32> to vector<8x64xf32>
    %49 = arith.negf %48 : vector<8x64xf32>
    %50 = math.exp %49 : vector<8x64xf32>
    %cst_21 = arith.constant 1.000000e+00 : f32
    %51 = vector.broadcast %cst_21 : f32 to vector<8x64xf32>
    %52 = arith.addf %51, %50 : vector<8x64xf32>
    %53 = arith.divf %51, %52 : vector<8x64xf32>
    %54 = vector.extract_strided_slice %47 {offsets = [0, 64], sizes = [8, 64], strides = [1, 1]} : vector<8x256xf32> to vector<8x64xf32>
    %55 = arith.negf %54 : vector<8x64xf32>
    %56 = math.exp %55 : vector<8x64xf32>
    %cst_22 = arith.constant 1.000000e+00 : f32
    %57 = vector.broadcast %cst_22 : f32 to vector<8x64xf32>
    %58 = arith.addf %57, %56 : vector<8x64xf32>
    %59 = arith.divf %57, %58 : vector<8x64xf32>
    %60 = vector.extract_strided_slice %47 {offsets = [0, 128], sizes = [8, 64], strides = [1, 1]} : vector<8x256xf32> to vector<8x64xf32>
    %61 = math.tanh %60 : vector<8x64xf32>
    %62 = vector.extract_strided_slice %47 {offsets = [0, 192], sizes = [8, 64], strides = [1, 1]} : vector<8x256xf32> to vector<8x64xf32>
    %63 = arith.negf %62 : vector<8x64xf32>
    %64 = math.exp %63 : vector<8x64xf32>
    %cst_23 = arith.constant 1.000000e+00 : f32
    %65 = vector.broadcast %cst_23 : f32 to vector<8x64xf32>
    %66 = arith.addf %65, %64 : vector<8x64xf32>
    %67 = arith.divf %65, %66 : vector<8x64xf32>
    %68 = arith.mulf %59, %38 : vector<8x64xf32>
    %69 = arith.mulf %53, %61 : vector<8x64xf32>
    %70 = arith.addf %68, %69 : vector<8x64xf32>
    %71 = math.tanh %70 : vector<8x64xf32>
    %72 = arith.mulf %67, %71 : vector<8x64xf32>
    %c2_i32 = arith.constant 2 : i32
    %c8_i32_24 = arith.constant 8 : i32
    %73 = arith.muli %c2_i32, %c8_i32_24 : i32
    %74 = tpu.assume_multiple %73, 8 : i32
    %75 = arith.index_cast %74 : i32 to index
    %c0_25 = arith.constant 0 : index
    %76 = vector.load %arg11[%75, %c0_25] : memref<64x256xf32, #tpu.memory_space<vmem>>, vector<8x256xf32>
    %c0_26 = arith.constant 0 : index
    %c0_27 = arith.constant 0 : index
    %77 = vector.load %arg2[%c0_26, %c0_27] : memref<64x256xf32, #tpu.memory_space<vmem>>, vector<64x256xf32>
    %cst_28 = arith.constant dense<0.000000e+00> : vector<8x256xf32>
    %78 = tpu.matmul %72, %77, %cst_28 {dimension_numbers = #tpu.dot_dimension_numbers<[1], [0], [0], [1], [0, 0, 1, 1], [], []>} : vector<8x64xf32>, vector<64x256xf32>, vector<8x256xf32> -> vector<8x256xf32>
    %79 = arith.addf %76, %78 : vector<8x256xf32>
    %80 = vector.extract_strided_slice %79 {offsets = [0, 0], sizes = [8, 64], strides = [1, 1]} : vector<8x256xf32> to vector<8x64xf32>
    %81 = arith.negf %80 : vector<8x64xf32>
    %82 = math.exp %81 : vector<8x64xf32>
    %cst_29 = arith.constant 1.000000e+00 : f32
    %83 = vector.broadcast %cst_29 : f32 to vector<8x64xf32>
    %84 = arith.addf %83, %82 : vector<8x64xf32>
    %85 = arith.divf %83, %84 : vector<8x64xf32>
    %86 = vector.extract_strided_slice %79 {offsets = [0, 64], sizes = [8, 64], strides = [1, 1]} : vector<8x256xf32> to vector<8x64xf32>
    %87 = arith.negf %86 : vector<8x64xf32>
    %88 = math.exp %87 : vector<8x64xf32>
    %cst_30 = arith.constant 1.000000e+00 : f32
    %89 = vector.broadcast %cst_30 : f32 to vector<8x64xf32>
    %90 = arith.addf %89, %88 : vector<8x64xf32>
    %91 = arith.divf %89, %90 : vector<8x64xf32>
    %92 = vector.extract_strided_slice %79 {offsets = [0, 128], sizes = [8, 64], strides = [1, 1]} : vector<8x256xf32> to vector<8x64xf32>
    %93 = math.tanh %92 : vector<8x64xf32>
    %94 = vector.extract_strided_slice %79 {offsets = [0, 192], sizes = [8, 64], strides = [1, 1]} : vector<8x256xf32> to vector<8x64xf32>
    %95 = arith.negf %94 : vector<8x64xf32>
    %96 = math.exp %95 : vector<8x64xf32>
    %cst_31 = arith.constant 1.000000e+00 : f32
    %97 = vector.broadcast %cst_31 : f32 to vector<8x64xf32>
    %98 = arith.addf %97, %96 : vector<8x64xf32>
    %99 = arith.divf %97, %98 : vector<8x64xf32>
    %100 = arith.mulf %91, %70 : vector<8x64xf32>
    %101 = arith.mulf %85, %93 : vector<8x64xf32>
    %102 = arith.addf %100, %101 : vector<8x64xf32>
    %103 = math.tanh %102 : vector<8x64xf32>
    %104 = arith.mulf %99, %103 : vector<8x64xf32>
    %c3_i32 = arith.constant 3 : i32
    %c8_i32_32 = arith.constant 8 : i32
    %105 = arith.muli %c3_i32, %c8_i32_32 : i32
    %106 = tpu.assume_multiple %105, 8 : i32
    %107 = arith.index_cast %106 : i32 to index
    %c0_33 = arith.constant 0 : index
    %108 = vector.load %arg11[%107, %c0_33] : memref<64x256xf32, #tpu.memory_space<vmem>>, vector<8x256xf32>
    %c0_34 = arith.constant 0 : index
    %c0_35 = arith.constant 0 : index
    %109 = vector.load %arg2[%c0_34, %c0_35] : memref<64x256xf32, #tpu.memory_space<vmem>>, vector<64x256xf32>
    %cst_36 = arith.constant dense<0.000000e+00> : vector<8x256xf32>
    %110 = tpu.matmul %104, %109, %cst_36 {dimension_numbers = #tpu.dot_dimension_numbers<[1], [0], [0], [1], [0, 0, 1, 1], [], []>} : vector<8x64xf32>, vector<64x256xf32>, vector<8x256xf32> -> vector<8x256xf32>
    %111 = arith.addf %108, %110 : vector<8x256xf32>
    %112 = vector.extract_strided_slice %111 {offsets = [0, 0], sizes = [8, 64], strides = [1, 1]} : vector<8x256xf32> to vector<8x64xf32>
    %113 = arith.negf %112 : vector<8x64xf32>
    %114 = math.exp %113 : vector<8x64xf32>
    %cst_37 = arith.constant 1.000000e+00 : f32
    %115 = vector.broadcast %cst_37 : f32 to vector<8x64xf32>
    %116 = arith.addf %115, %114 : vector<8x64xf32>
    %117 = arith.divf %115, %116 : vector<8x64xf32>
    %118 = vector.extract_strided_slice %111 {offsets = [0, 64], sizes = [8, 64], strides = [1, 1]} : vector<8x256xf32> to vector<8x64xf32>
    %119 = arith.negf %118 : vector<8x64xf32>
    %120 = math.exp %119 : vector<8x64xf32>
    %cst_38 = arith.constant 1.000000e+00 : f32
    %121 = vector.broadcast %cst_38 : f32 to vector<8x64xf32>
    %122 = arith.addf %121, %120 : vector<8x64xf32>
    %123 = arith.divf %121, %122 : vector<8x64xf32>
    %124 = vector.extract_strided_slice %111 {offsets = [0, 128], sizes = [8, 64], strides = [1, 1]} : vector<8x256xf32> to vector<8x64xf32>
    %125 = math.tanh %124 : vector<8x64xf32>
    %126 = vector.extract_strided_slice %111 {offsets = [0, 192], sizes = [8, 64], strides = [1, 1]} : vector<8x256xf32> to vector<8x64xf32>
    %127 = arith.negf %126 : vector<8x64xf32>
    %128 = math.exp %127 : vector<8x64xf32>
    %cst_39 = arith.constant 1.000000e+00 : f32
    %129 = vector.broadcast %cst_39 : f32 to vector<8x64xf32>
    %130 = arith.addf %129, %128 : vector<8x64xf32>
    %131 = arith.divf %129, %130 : vector<8x64xf32>
    %132 = arith.mulf %123, %102 : vector<8x64xf32>
    %133 = arith.mulf %117, %125 : vector<8x64xf32>
    %134 = arith.addf %132, %133 : vector<8x64xf32>
    %135 = math.tanh %134 : vector<8x64xf32>
    %136 = arith.mulf %131, %135 : vector<8x64xf32>
    %c4_i32 = arith.constant 4 : i32
    %c8_i32_40 = arith.constant 8 : i32
    %137 = arith.muli %c4_i32, %c8_i32_40 : i32
    %138 = tpu.assume_multiple %137, 8 : i32
    %139 = arith.index_cast %138 : i32 to index
    %c0_41 = arith.constant 0 : index
    %140 = vector.load %arg11[%139, %c0_41] : memref<64x256xf32, #tpu.memory_space<vmem>>, vector<8x256xf32>
    %c0_42 = arith.constant 0 : index
    %c0_43 = arith.constant 0 : index
    %141 = vector.load %arg2[%c0_42, %c0_43] : memref<64x256xf32, #tpu.memory_space<vmem>>, vector<64x256xf32>
    %cst_44 = arith.constant dense<0.000000e+00> : vector<8x256xf32>
    %142 = tpu.matmul %136, %141, %cst_44 {dimension_numbers = #tpu.dot_dimension_numbers<[1], [0], [0], [1], [0, 0, 1, 1], [], []>} : vector<8x64xf32>, vector<64x256xf32>, vector<8x256xf32> -> vector<8x256xf32>
    %143 = arith.addf %140, %142 : vector<8x256xf32>
    %144 = vector.extract_strided_slice %143 {offsets = [0, 0], sizes = [8, 64], strides = [1, 1]} : vector<8x256xf32> to vector<8x64xf32>
    %145 = arith.negf %144 : vector<8x64xf32>
    %146 = math.exp %145 : vector<8x64xf32>
    %cst_45 = arith.constant 1.000000e+00 : f32
    %147 = vector.broadcast %cst_45 : f32 to vector<8x64xf32>
    %148 = arith.addf %147, %146 : vector<8x64xf32>
    %149 = arith.divf %147, %148 : vector<8x64xf32>
    %150 = vector.extract_strided_slice %143 {offsets = [0, 64], sizes = [8, 64], strides = [1, 1]} : vector<8x256xf32> to vector<8x64xf32>
    %151 = arith.negf %150 : vector<8x64xf32>
    %152 = math.exp %151 : vector<8x64xf32>
    %cst_46 = arith.constant 1.000000e+00 : f32
    %153 = vector.broadcast %cst_46 : f32 to vector<8x64xf32>
    %154 = arith.addf %153, %152 : vector<8x64xf32>
    %155 = arith.divf %153, %154 : vector<8x64xf32>
    %156 = vector.extract_strided_slice %143 {offsets = [0, 128], sizes = [8, 64], strides = [1, 1]} : vector<8x256xf32> to vector<8x64xf32>
    %157 = math.tanh %156 : vector<8x64xf32>
    %158 = vector.extract_strided_slice %143 {offsets = [0, 192], sizes = [8, 64], strides = [1, 1]} : vector<8x256xf32> to vector<8x64xf32>
    %159 = arith.negf %158 : vector<8x64xf32>
    %160 = math.exp %159 : vector<8x64xf32>
    %cst_47 = arith.constant 1.000000e+00 : f32
    %161 = vector.broadcast %cst_47 : f32 to vector<8x64xf32>
    %162 = arith.addf %161, %160 : vector<8x64xf32>
    %163 = arith.divf %161, %162 : vector<8x64xf32>
    %164 = arith.mulf %155, %134 : vector<8x64xf32>
    %165 = arith.mulf %149, %157 : vector<8x64xf32>
    %166 = arith.addf %164, %165 : vector<8x64xf32>
    %167 = math.tanh %166 : vector<8x64xf32>
    %168 = arith.mulf %163, %167 : vector<8x64xf32>
    %c5_i32 = arith.constant 5 : i32
    %c8_i32_48 = arith.constant 8 : i32
    %169 = arith.muli %c5_i32, %c8_i32_48 : i32
    %170 = tpu.assume_multiple %169, 8 : i32
    %171 = arith.index_cast %170 : i32 to index
    %c0_49 = arith.constant 0 : index
    %172 = vector.load %arg11[%171, %c0_49] : memref<64x256xf32, #tpu.memory_space<vmem>>, vector<8x256xf32>
    %c0_50 = arith.constant 0 : index
    %c0_51 = arith.constant 0 : index
    %173 = vector.load %arg2[%c0_50, %c0_51] : memref<64x256xf32, #tpu.memory_space<vmem>>, vector<64x256xf32>
    %cst_52 = arith.constant dense<0.000000e+00> : vector<8x256xf32>
    %174 = tpu.matmul %168, %173, %cst_52 {dimension_numbers = #tpu.dot_dimension_numbers<[1], [0], [0], [1], [0, 0, 1, 1], [], []>} : vector<8x64xf32>, vector<64x256xf32>, vector<8x256xf32> -> vector<8x256xf32>
    %175 = arith.addf %172, %174 : vector<8x256xf32>
    %176 = vector.extract_strided_slice %175 {offsets = [0, 0], sizes = [8, 64], strides = [1, 1]} : vector<8x256xf32> to vector<8x64xf32>
    %177 = arith.negf %176 : vector<8x64xf32>
    %178 = math.exp %177 : vector<8x64xf32>
    %cst_53 = arith.constant 1.000000e+00 : f32
    %179 = vector.broadcast %cst_53 : f32 to vector<8x64xf32>
    %180 = arith.addf %179, %178 : vector<8x64xf32>
    %181 = arith.divf %179, %180 : vector<8x64xf32>
    %182 = vector.extract_strided_slice %175 {offsets = [0, 64], sizes = [8, 64], strides = [1, 1]} : vector<8x256xf32> to vector<8x64xf32>
    %183 = arith.negf %182 : vector<8x64xf32>
    %184 = math.exp %183 : vector<8x64xf32>
    %cst_54 = arith.constant 1.000000e+00 : f32
    %185 = vector.broadcast %cst_54 : f32 to vector<8x64xf32>
    %186 = arith.addf %185, %184 : vector<8x64xf32>
    %187 = arith.divf %185, %186 : vector<8x64xf32>
    %188 = vector.extract_strided_slice %175 {offsets = [0, 128], sizes = [8, 64], strides = [1, 1]} : vector<8x256xf32> to vector<8x64xf32>
    %189 = math.tanh %188 : vector<8x64xf32>
    %190 = vector.extract_strided_slice %175 {offsets = [0, 192], sizes = [8, 64], strides = [1, 1]} : vector<8x256xf32> to vector<8x64xf32>
    %191 = arith.negf %190 : vector<8x64xf32>
    %192 = math.exp %191 : vector<8x64xf32>
    %cst_55 = arith.constant 1.000000e+00 : f32
    %193 = vector.broadcast %cst_55 : f32 to vector<8x64xf32>
    %194 = arith.addf %193, %192 : vector<8x64xf32>
    %195 = arith.divf %193, %194 : vector<8x64xf32>
    %196 = arith.mulf %187, %166 : vector<8x64xf32>
    %197 = arith.mulf %181, %189 : vector<8x64xf32>
    %198 = arith.addf %196, %197 : vector<8x64xf32>
    %199 = math.tanh %198 : vector<8x64xf32>
    %200 = arith.mulf %195, %199 : vector<8x64xf32>
    %c6_i32 = arith.constant 6 : i32
    %c8_i32_56 = arith.constant 8 : i32
    %201 = arith.muli %c6_i32, %c8_i32_56 : i32
    %202 = tpu.assume_multiple %201, 8 : i32
    %203 = arith.index_cast %202 : i32 to index
    %c0_57 = arith.constant 0 : index
    %204 = vector.load %arg11[%203, %c0_57] : memref<64x256xf32, #tpu.memory_space<vmem>>, vector<8x256xf32>
    %c0_58 = arith.constant 0 : index
    %c0_59 = arith.constant 0 : index
    %205 = vector.load %arg2[%c0_58, %c0_59] : memref<64x256xf32, #tpu.memory_space<vmem>>, vector<64x256xf32>
    %cst_60 = arith.constant dense<0.000000e+00> : vector<8x256xf32>
    %206 = tpu.matmul %200, %205, %cst_60 {dimension_numbers = #tpu.dot_dimension_numbers<[1], [0], [0], [1], [0, 0, 1, 1], [], []>} : vector<8x64xf32>, vector<64x256xf32>, vector<8x256xf32> -> vector<8x256xf32>
    %207 = arith.addf %204, %206 : vector<8x256xf32>
    %208 = vector.extract_strided_slice %207 {offsets = [0, 0], sizes = [8, 64], strides = [1, 1]} : vector<8x256xf32> to vector<8x64xf32>
    %209 = arith.negf %208 : vector<8x64xf32>
    %210 = math.exp %209 : vector<8x64xf32>
    %cst_61 = arith.constant 1.000000e+00 : f32
    %211 = vector.broadcast %cst_61 : f32 to vector<8x64xf32>
    %212 = arith.addf %211, %210 : vector<8x64xf32>
    %213 = arith.divf %211, %212 : vector<8x64xf32>
    %214 = vector.extract_strided_slice %207 {offsets = [0, 64], sizes = [8, 64], strides = [1, 1]} : vector<8x256xf32> to vector<8x64xf32>
    %215 = arith.negf %214 : vector<8x64xf32>
    %216 = math.exp %215 : vector<8x64xf32>
    %cst_62 = arith.constant 1.000000e+00 : f32
    %217 = vector.broadcast %cst_62 : f32 to vector<8x64xf32>
    %218 = arith.addf %217, %216 : vector<8x64xf32>
    %219 = arith.divf %217, %218 : vector<8x64xf32>
    %220 = vector.extract_strided_slice %207 {offsets = [0, 128], sizes = [8, 64], strides = [1, 1]} : vector<8x256xf32> to vector<8x64xf32>
    %221 = math.tanh %220 : vector<8x64xf32>
    %222 = vector.extract_strided_slice %207 {offsets = [0, 192], sizes = [8, 64], strides = [1, 1]} : vector<8x256xf32> to vector<8x64xf32>
    %223 = arith.negf %222 : vector<8x64xf32>
    %224 = math.exp %223 : vector<8x64xf32>
    %cst_63 = arith.constant 1.000000e+00 : f32
    %225 = vector.broadcast %cst_63 : f32 to vector<8x64xf32>
    %226 = arith.addf %225, %224 : vector<8x64xf32>
    %227 = arith.divf %225, %226 : vector<8x64xf32>
    %228 = arith.mulf %219, %198 : vector<8x64xf32>
    %229 = arith.mulf %213, %221 : vector<8x64xf32>
    %230 = arith.addf %228, %229 : vector<8x64xf32>
    %231 = math.tanh %230 : vector<8x64xf32>
    %232 = arith.mulf %227, %231 : vector<8x64xf32>
    %c7_i32 = arith.constant 7 : i32
    %c8_i32_64 = arith.constant 8 : i32
    %233 = arith.muli %c7_i32, %c8_i32_64 : i32
    %234 = tpu.assume_multiple %233, 8 : i32
    %235 = arith.index_cast %234 : i32 to index
    %c0_65 = arith.constant 0 : index
    %236 = vector.load %arg11[%235, %c0_65] : memref<64x256xf32, #tpu.memory_space<vmem>>, vector<8x256xf32>
    %c0_66 = arith.constant 0 : index
    %c0_67 = arith.constant 0 : index
    %237 = vector.load %arg2[%c0_66, %c0_67] : memref<64x256xf32, #tpu.memory_space<vmem>>, vector<64x256xf32>
    %cst_68 = arith.constant dense<0.000000e+00> : vector<8x256xf32>
    %238 = tpu.matmul %232, %237, %cst_68 {dimension_numbers = #tpu.dot_dimension_numbers<[1], [0], [0], [1], [0, 0, 1, 1], [], []>} : vector<8x64xf32>, vector<64x256xf32>, vector<8x256xf32> -> vector<8x256xf32>
    %239 = arith.addf %236, %238 : vector<8x256xf32>
    %240 = vector.extract_strided_slice %239 {offsets = [0, 0], sizes = [8, 64], strides = [1, 1]} : vector<8x256xf32> to vector<8x64xf32>
    %241 = arith.negf %240 : vector<8x64xf32>
    %242 = math.exp %241 : vector<8x64xf32>
    %cst_69 = arith.constant 1.000000e+00 : f32
    %243 = vector.broadcast %cst_69 : f32 to vector<8x64xf32>
    %244 = arith.addf %243, %242 : vector<8x64xf32>
    %245 = arith.divf %243, %244 : vector<8x64xf32>
    %246 = vector.extract_strided_slice %239 {offsets = [0, 64], sizes = [8, 64], strides = [1, 1]} : vector<8x256xf32> to vector<8x64xf32>
    %247 = arith.negf %246 : vector<8x64xf32>
    %248 = math.exp %247 : vector<8x64xf32>
    %cst_70 = arith.constant 1.000000e+00 : f32
    %249 = vector.broadcast %cst_70 : f32 to vector<8x64xf32>
    %250 = arith.addf %249, %248 : vector<8x64xf32>
    %251 = arith.divf %249, %250 : vector<8x64xf32>
    %252 = vector.extract_strided_slice %239 {offsets = [0, 128], sizes = [8, 64], strides = [1, 1]} : vector<8x256xf32> to vector<8x64xf32>
    %253 = math.tanh %252 : vector<8x64xf32>
    %254 = vector.extract_strided_slice %239 {offsets = [0, 192], sizes = [8, 64], strides = [1, 1]} : vector<8x256xf32> to vector<8x64xf32>
    %255 = arith.negf %254 : vector<8x64xf32>
    %256 = math.exp %255 : vector<8x64xf32>
    %cst_71 = arith.constant 1.000000e+00 : f32
    %257 = vector.broadcast %cst_71 : f32 to vector<8x64xf32>
    %258 = arith.addf %257, %256 : vector<8x64xf32>
    %259 = arith.divf %257, %258 : vector<8x64xf32>
    %260 = arith.mulf %251, %230 : vector<8x64xf32>
    %261 = arith.mulf %245, %253 : vector<8x64xf32>
    %262 = arith.addf %260, %261 : vector<8x64xf32>
    %263 = math.tanh %262 : vector<8x64xf32>
    %264 = arith.mulf %259, %263 : vector<8x64xf32>
    %c8_i32_72 = arith.constant 8 : i32
    %c0_73 = arith.constant 0 : index
    %c0_74 = arith.constant 0 : index
    %265 = vector.load %arg5[%c0_73, %c0_74] : memref<64x32xf32, #tpu.memory_space<vmem>>, vector<64x32xf32>
    %cst_75 = arith.constant dense<0.000000e+00> : vector<8x32xf32>
    %266 = tpu.matmul %264, %265, %cst_75 {dimension_numbers = #tpu.dot_dimension_numbers<[1], [0], [0], [1], [0, 0, 1, 1], [], []>} : vector<8x64xf32>, vector<64x32xf32>, vector<8x32xf32> -> vector<8x32xf32>
    %c0_76 = arith.constant 0 : index
    %c0_77 = arith.constant 0 : index
    %267 = vector.load %arg4[%c0_76, %c0_77] : memref<8x1xf32, #tpu.memory_space<vmem>>, vector<8x1xf32>
    %c0_78 = arith.constant 0 : index
    %c0_79 = arith.constant 0 : index
    %268 = vector.load %arg6[%c0_78, %c0_79] : memref<1x32xf32, #tpu.memory_space<vmem>>, vector<1x32xf32>
    %269 = vector.broadcast %267 : vector<8x1xf32> to vector<8x32xf32>
    %270 = vector.broadcast %268 : vector<1x32xf32> to vector<8x32xf32>
    %271 = arith.mulf %269, %270 : vector<8x32xf32>
    %272 = arith.addf %266, %271 : vector<8x32xf32>
    %c0_80 = arith.constant 0 : index
    %c0_81 = arith.constant 0 : index
    %273 = vector.load %arg7[%c0_80, %c0_81] : memref<1x32xf32, #tpu.memory_space<vmem>>, vector<1x32xf32>
    %274 = vector.broadcast %273 : vector<1x32xf32> to vector<8x32xf32>
    %275 = arith.addf %272, %274 : vector<8x32xf32>
    %cst_82 = arith.constant 0.000000e+00 : f32
    %276 = vector.broadcast %cst_82 : f32 to vector<8x32xf32>
    %277 = arith.maximumf %275, %276 : vector<8x32xf32>
    %c0_83 = arith.constant 0 : index
    %c0_84 = arith.constant 0 : index
    %278 = vector.load %arg8[%c0_83, %c0_84] : memref<1x32xf32, #tpu.memory_space<vmem>>, vector<1x32xf32>
    %279 = vector.broadcast %278 : vector<1x32xf32> to vector<8x32xf32>
    %280 = arith.mulf %277, %279 : vector<8x32xf32>
    %cst_85 = arith.constant dense<0.000000e+00> : vector<8xf32>
    %281 = vector.multi_reduction <add>, %280, %cst_85 [1] : vector<8x32xf32> to vector<8xf32>
    %282 = vector.shape_cast %281 : vector<8xf32> to vector<8x1xf32>
    %c0_86 = arith.constant 0 : index
    %c0_87 = arith.constant 0 : index
    %283 = vector.load %arg9[%c0_86, %c0_87] : memref<1x1xf32, #tpu.memory_space<vmem>>, vector<1x1xf32>
    %284 = vector.broadcast %283 : vector<1x1xf32> to vector<8x1xf32>
    %285 = arith.addf %282, %284 : vector<8x1xf32>
    %c0_88 = arith.constant 0 : index
    %c0_89 = arith.constant 0 : index
    %286 = vector.load %arg10[%c0_88, %c0_89] : memref<8x1xf32, #tpu.memory_space<vmem>>, vector<8x1xf32>
    tpu.vector_store %arg10[%c0_88, %c0_89], %285 {strides = array<i32>} : memref<8x1xf32, #tpu.memory_space<vmem>>, vector<8x1xf32>,
    return
  }
}

</mosaic_0001>

<llo_original>
// kernel: lstm_forward.1
$region0: #{lstm_forward.1}
  #allocation0 [shape = 'u32[]', space=smem, size = 0x4, offset = 0x4, fixed_abs, tag = 'smem constant byte address 0x4 - core index']
  #allocation1 [shape = 'u32[72,128]{1,0:T(1,128)}', space=vmem, size = 0x9000, scoped, tag = 'internal scratch']
  #allocation2 [shape = 'f32[64,256]{1,0:T(8,128)}', space=vmem, size = 0x10000, scoped, tag = 'scratch operand']
  #allocation3 [shape = 'f32[1,1]{1,0:T(1,128)S(1)}', space=vmem, size = 0x200, scoped, tag = 'scoped memory for lstm_forward.1']
  %s0 = inlined_call_operand.vmem [shape: f32[64,4], index: 0, kind: input, shape index: {}]
  %s1 = inlined_call_operand.vmem [shape: f32[4,256], index: 1, kind: input, shape index: {}]
  %s2 = inlined_call_operand.vmem [shape: f32[64,256], index: 2, kind: input, shape index: {}]
  %s3 = inlined_call_operand.vmem [shape: f32[1,256], index: 3, kind: input, shape index: {}]
  %s4 = inlined_call_operand.vmem [shape: f32[8,1], index: 4, kind: input, shape index: {}]
  %s5 = inlined_call_operand.vmem [shape: f32[64,32], index: 5, kind: input, shape index: {}]
  %s6 = inlined_call_operand.vmem [shape: f32[1,32], index: 6, kind: input, shape index: {}]
  %s7 = inlined_call_operand.vmem [shape: f32[1,32], index: 7, kind: input, shape index: {}]
  %s8 = inlined_call_operand.vmem [shape: f32[1,32], index: 8, kind: input, shape index: {}]
  %s9 = inlined_call_operand.<no memory space> [shape: f32[1,1], index: 9, kind: input, shape index: {}]
  %s10 = inlined_call_operand.vmem [shape: f32[8,1], index: 10, kind: output, shape index: {}]
  %s11 = sld [smem:[#allocation0]]
  $region50: #{lstm_forward.1} parent=0
    _
  %s13 = ssub.s32 1, %s11
  %s14 = scalar_select 0, %s13, %s11
  %v15 = vstv %s9
  %16 = vst [vmem:[#allocation3] sm:$0x1] %v15
  // Predicated region
  $region2: #{lstm_forward.1} parent=0 // pred_check
    _
  $region3: #{lstm_forward.1} parent=0 // pred_check_branch
    %18 = sbr.rel (0) target = $region5
  $region4: #{lstm_forward.1} parent=0 // pred_region
    _
  $region5: #{lstm_forward.1} parent=0 // pred_fallthru
    _
  // Predicated region
  $region6: #{lstm_forward.1} parent=0 // pred_check
    _
  $region7: #{lstm_forward.1} parent=0 // pred_check_branch
    %20 = sbr.rel (0) target = $region9
  $region8: #{lstm_forward.1} parent=0 // pred_region
    _
  $region9: #{lstm_forward.1} parent=0 // pred_fallthru
    _
  // Predicated region
  $region10: #{lstm_forward.1} parent=0 // pred_check
    _
  $region11: #{lstm_forward.1} parent=0 // pred_check_branch
    %22 = sbr.rel (0) target = $region13
  $region12: #{lstm_forward.1} parent=0 // pred_region
    _
  $region13: #{lstm_forward.1} parent=0 // pred_fallthru
    _
  // Predicated region
  $region14: #{lstm_forward.1} parent=0 // pred_check
    _
  $region15: #{lstm_forward.1} parent=0 // pred_check_branch
    %24 = sbr.rel (0) target = $region17
  $region16: #{lstm_forward.1} parent=0 // pred_region
    _
  $region17: #{lstm_forward.1} parent=0 // pred_fallthru
    _
  // Predicated region
  $region18: #{lstm_forward.1} parent=0 // pred_check
    _
  $region19: #{lstm_forward.1} parent=0 // pred_check_branch
    %26 = sbr.rel (0) target = $region21
  $region20: #{lstm_forward.1} parent=0 // pred_region
    _
  $region21: #{lstm_forward.1} parent=0 // pred_fallthru
    _
  // Predicated region
  $region22: #{lstm_forward.1} parent=0 // pred_check
    _
  $region23: #{lstm_forward.1} parent=0 // pred_check_branch
    %28 = sbr.rel (0) target = $region25
  $region24: #{lstm_forward.1} parent=0 // pred_region
    _
  $region25: #{lstm_forward.1} parent=0 // pred_fallthru
    _
  // Predicated region
  $region26: #{lstm_forward.1} parent=0 // pred_check
    _
  $region27: #{lstm_forward.1} parent=0 // pred_check_branch
    %30 = sbr.rel (0) target = $region29
  $region28: #{lstm_forward.1} parent=0 // pred_region
    _
  $region29: #{lstm_forward.1} parent=0 // pred_fallthru
    _
  // Predicated region
  $region30: #{lstm_forward.1} parent=0 // pred_check
    _
  $region31: #{lstm_forward.1} parent=0 // pred_check_branch
    %32 = sbr.rel (0) target = $region33
  $region32: #{lstm_forward.1} parent=0 // pred_region
    _
  $region33: #{lstm_forward.1} parent=0 // pred_fallthru
    _
  // Predicated region
  $region34: #{lstm_forward.1} parent=0 // pred_check
    _
  $region35: #{lstm_forward.1} parent=0 // pred_check_branch
    %34 = sbr.rel (0) target = $region37
  $region36: #{lstm_forward.1} parent=0 // pred_region
    _
  $region37: #{lstm_forward.1} parent=0 // pred_fallthru
    _
  // Predicated region
  $region38: #{lstm_forward.1} parent=0 // pred_check
    _
  $region39: #{lstm_forward.1} parent=0 // pred_check_branch
    %36 = sbr.rel (0) target = $region41
  $region40: #{lstm_forward.1} parent=0 // pred_region
    _
  $region41: #{lstm_forward.1} parent=0 // pred_fallthru
    _
  %v37 = vld [vmem:[%s0] sm:$0xff]
  %v38 = vld [vmem:[%s0 + $0x8] sm:$0xff]
  %v39 = vld [vmem:[%s0 + $0x10] sm:$0xff]
  %v40 = vld [vmem:[%s0 + $0x18] sm:$0xff]
  %v41 = vld [vmem:[%s0 + $0x20] sm:$0xff]
  %v42 = vld [vmem:[%s0 + $0x28] sm:$0xff]
  %v43 = vld [vmem:[%s0 + $0x30] sm:$0xff]
  %v44 = vld [vmem:[%s0 + $0x38] sm:$0xff]
  %v45 = vld [vmem:[%s1] sm:$0xff]
  %v46 = vld [vmem:[%s3] sm:$0x3]
  %v48 = vperm.slane %v46, 0
  %v49 = vperm.slane %v46, 1
  %53 = vst [vmem:[#allocation1] ss:$2 sm:$0xff] %v45
  %v54 = vld.sshfl [vmem:[#allocation1] sm:$0xff pattern:$0x75316420]
  %v55 = vld.sshfl [vmem:[#allocation1 + $0x8] sm:$0xff pattern:$0x75316420]
  %vm56 = vcmask 31744
  %v58 = vsel %vm56, %v37, 0
  %v61 = vsel %vm56, %v38, 0
  %v64 = vsel %vm56, %v39, 0
  %v67 = vsel %vm56, %v40, 0
  %v70 = vsel %vm56, %v41, 0
  %v73 = vsel %vm56, %v42, 0
  %v76 = vsel %vm56, %v43, 0
  %v79 = vsel %vm56, %v44, 0
  %vm81 = vcmask 1043456
  %v82 = vsel %vm81, %v54, 0
  %v84 = vsel %vm81, %v55, 0
  %86 = vmatpush.msra.mxu0 0.0
  %87 = vmatpush.msra.mxu0 0.0
  %88 = vmatpush.msra.mxu0 0.0
  %89 = vmatpush.msra.mxu0 0.0
  %90 = vmatpush.msra.mxu0 0.0
  %91 = vmatpush.msra.mxu0 0.0
  %92 = vmatpush.msra.mxu0 0.0
  %93 = vmatpush.msra.mxu0 0.0
  %94 = vmatpush.msra.mxu0 0.0
  %95 = vmatpush.msra.mxu0 0.0
  %96 = vmatpush.msra.mxu0 0.0
  %97 = vmatpush.msra.mxu0 0.0
  %98 = vmatpush.msra.mxu0 0.0
  %99 = vmatpush.msra.mxu0 0.0
  %100 = vmatpush.msra.mxu0 0.0
  %101 = vmatpush.msra.mxu0 %v82
  %102 = vmatmul.f32.gmra.mxu0 %v58
  %v103 = vpop.f32.mrf.mxu0
  %v104 = vadd.f32 %v48, %v103
  %105 = vmatmul.f32.gmra.mxu0 %v61
  %v106 = vpop.f32.mrf.mxu0
  %v107 = vadd.f32 %v48, %v106
  %108 = vmatmul.f32.gmra.mxu0 %v64
  %v109 = vpop.f32.mrf.mxu0
  %v110 = vadd.f32 %v48, %v109
  %111 = vmatmul.f32.gmra.mxu0 %v67
  %v112 = vpop.f32.mrf.mxu0
  %v113 = vadd.f32 %v48, %v112
  %114 = vmatmul.f32.gmra.mxu0 %v70
  %v115 = vpop.f32.mrf.mxu0
  %v116 = vadd.f32 %v48, %v115
  %117 = vmatmul.f32.gmra.mxu0 %v73
  %v118 = vpop.f32.mrf.mxu0
  %v119 = vadd.f32 %v48, %v118
  %120 = vmatmul.f32.gmra.mxu0 %v76
  %v121 = vpop.f32.mrf.mxu0
  %v122 = vadd.f32 %v48, %v121
  %123 = vmatmul.f32.gmra.mxu0 %v79
  %v124 = vpop.f32.mrf.mxu0
  %v125 = vadd.f32 %v48, %v124
  %126 = vdwg.mxu0
  %127 = vmatpush.msra.mxu0 0.0
  %128 = vmatpush.msra.mxu0 0.0
  %129 = vmatpush.msra.mxu0 0.0
  %130 = vmatpush.msra.mxu0 0.0
  %131 = vmatpush.msra.mxu0 0.0
  %132 = vmatpush.msra.mxu0 0.0
  %133 = vmatpush.msra.mxu0 0.0
  %134 = vmatpush.msra.mxu0 0.0
  %135 = vmatpush.msra.mxu0 0.0
  %136 = vmatpush.msra.mxu0 0.0
  %137 = vmatpush.msra.mxu0 0.0
  %138 = vmatpush.msra.mxu0 0.0
  %139 = vmatpush.msra.mxu0 0.0
  %140 = vmatpush.msra.mxu0 0.0
  %141 = vmatpush.msra.mxu0 0.0
  %142 = vmatpush.msra.mxu0 %v84
  %143 = vmatmul.f32.gmra.mxu0 %v58
  %v144 = vpop.f32.mrf.mxu0
  %v145 = vadd.f32 %v49, %v144
  %146 = vmatmul.f32.gmra.mxu0 %v61
  %v147 = vpop.f32.mrf.mxu0
  %v148 = vadd.f32 %v49, %v147
  %149 = vmatmul.f32.gmra.mxu0 %v64
  %v150 = vpop.f32.mrf.mxu0
  %v151 = vadd.f32 %v49, %v150
  %152 = vmatmul.f32.gmra.mxu0 %v67
  %v153 = vpop.f32.mrf.mxu0
  %v154 = vadd.f32 %v49, %v153
  %155 = vmatmul.f32.gmra.mxu0 %v70
  %v156 = vpop.f32.mrf.mxu0
  %v157 = vadd.f32 %v49, %v156
  %158 = vmatmul.f32.gmra.mxu0 %v73
  %v159 = vpop.f32.mrf.mxu0
  %v160 = vadd.f32 %v49, %v159
  %161 = vmatmul.f32.gmra.mxu0 %v76
  %v162 = vpop.f32.mrf.mxu0
  %v163 = vadd.f32 %v49, %v162
  %164 = vmatmul.f32.gmra.mxu0 %v79
  %v165 = vpop.f32.mrf.mxu0
  %v166 = vadd.f32 %v49, %v165
  %167 = vdwg.mxu0
  %168 = vst [vmem:[#allocation2] sm:$0xff] %v104
  %169 = vst [vmem:[#allocation2 + $0x8] sm:$0xff] %v145
  %170 = vst [vmem:[#allocation2 + $0x10] sm:$0xff] %v107
  %171 = vst [vmem:[#allocation2 + $0x18] sm:$0xff] %v148
  %172 = vst [vmem:[#allocation2 + $0x20] sm:$0xff] %v110
  %173 = vst [vmem:[#allocation2 + $0x28] sm:$0xff] %v151
  %174 = vst [vmem:[#allocation2 + $0x30] sm:$0xff] %v113
  %175 = vst [vmem:[#allocation2 + $0x38] sm:$0xff] %v154
  %176 = vst [vmem:[#allocation2 + $0x40] sm:$0xff] %v116
  %177 = vst [vmem:[#allocation2 + $0x48] sm:$0xff] %v157
  %178 = vst [vmem:[#allocation2 + $0x50] sm:$0xff] %v119
  %179 = vst [vmem:[#allocation2 + $0x58] sm:$0xff] %v160
  %180 = vst [vmem:[#allocation2 + $0x60] sm:$0xff] %v122
  %181 = vst [vmem:[#allocation2 + $0x68] sm:$0xff] %v163
  %182 = vst [vmem:[#allocation2 + $0x70] sm:$0xff] %v125
  %183 = vst [vmem:[#allocation2 + $0x78] sm:$0xff] %v166
  %s184 = smul.u32 0, 2
  %s185 = smul.addr %s184, 8
  %s186 = scalar_lea.vmem [#allocation2], %s185
  %v187 = vld [vmem:[%s186] sm:$0xff]
  %v188 = vld [vmem:[%s186 + $0x8] sm:$0xff]
  %v189 = vld [vmem:[%s2] sm:$0xff]
  %v190 = vld [vmem:[%s2 + $0x8] sm:$0xff]
  %v191 = vld [vmem:[%s2 + $0x10] sm:$0xff]
  %v192 = vld [vmem:[%s2 + $0x18] sm:$0xff]
  %v193 = vld [vmem:[%s2 + $0x20] sm:$0xff]
  %v194 = vld [vmem:[%s2 + $0x28] sm:$0xff]
  %v195 = vld [vmem:[%s2 + $0x30] sm:$0xff]
  %v196 = vld [vmem:[%s2 + $0x38] sm:$0xff]
  %v197 = vld [vmem:[%s2 + $0x40] sm:$0xff]
  %v198 = vld [vmem:[%s2 + $0x48] sm:$0xff]
  %v199 = vld [vmem:[%s2 + $0x50] sm:$0xff]
  %v200 = vld [vmem:[%s2 + $0x58] sm:$0xff]
  %v201 = vld [vmem:[%s2 + $0x60] sm:$0xff]
  %v202 = vld [vmem:[%s2 + $0x68] sm:$0xff]
  %v203 = vld [vmem:[%s2 + $0x70] sm:$0xff]
  %v204 = vld [vmem:[%s2 + $0x78] sm:$0xff]
  %vm205 = vcmask 523264
  %v207 = vsel %vm205, 0.0, 0
  %209 = vmatpush.msra.mxu0 0.0
  %210 = vmatpush.msra.mxu0 0.0
  %211 = vmatpush.msra.mxu0 0.0
  %212 = vmatpush.msra.mxu0 0.0
  %213 = vmatpush.msra.mxu0 0.0
  %214 = vmatpush.msra.mxu0 0.0
  %215 = vmatpush.msra.mxu0 0.0
  %216 = vmatpush.msra.mxu0 0.0
  %217 = vmatpush.msra.mxu0 %v203
  %218 = vmatpush.msra.mxu0 %v201
  %219 = vmatpush.msra.mxu0 %v199
  %220 = vmatpush.msra.mxu0 %v197
  %221 = vmatpush.msra.mxu0 %v195
  %222 = vmatpush.msra.mxu0 %v193
  %223 = vmatpush.msra.mxu0 %v191
  %224 = vmatpush.msra.mxu0 %v189
  %225 = vmatmul.f32.gmra.mxu0 %v207
  %v226 = vpop.f32.mrf.mxu0
  %v227 = vadd.f32 0.0, %v226
  %228 = vdwg.mxu0
  %229 = vmatpush.msra.mxu0 0.0
  %230 = vmatpush.msra.mxu0 0.0
  %231 = vmatpush.msra.mxu0 0.0
  %232 = vmatpush.msra.mxu0 0.0
  %233 = vmatpush.msra.mxu0 0.0
  %234 = vmatpush.msra.mxu0 0.0
  %235 = vmatpush.msra.mxu0 0.0
  %236 = vmatpush.msra.mxu0 0.0
  %237 = vmatpush.msra.mxu0 %v204
  %238 = vmatpush.msra.mxu0 %v202
  %239 = vmatpush.msra.mxu0 %v200
  %240 = vmatpush.msra.mxu0 %v198
  %241 = vmatpush.msra.mxu0 %v196
  %242 = vmatpush.msra.mxu0 %v194
  %243 = vmatpush.msra.mxu0 %v192
  %244 = vmatpush.msra.mxu0 %v190
  %245 = vmatmul.f32.gmra.mxu0 %v207
  %v246 = vpop.f32.mrf.mxu0
  %v247 = vadd.f32 0.0, %v246
  %248 = vdwg.mxu0
  %v249 = vadd.f32 %v187, %v227
  %v250 = vadd.f32 %v188, %v247
  %v251 = vxor.u32 %v249, 2147483648
  %v252 = vmul.f32 %v251, 1.442695
  %v253 = vpow.pop %v252
  %v254 = vadd.f32 %v253, 1.0
  %v255 = vrcp.pop %v254
  %v256 = vmul.f32 %v254, %v255
  %v257 = vsub.f32 1.0, %v256
  %v258 = vmul.f32 %v255, %v257
  %v259 = vadd.f32 %v255, %v258
  %vm260 = vweird.f32 %v254
  %vm261 = vweird.f32 %v255
  %vm262 = vmor %vm260, %vm261
  %v263 = vsel %vm262, %v255, %v259
  %v264 = vand.u32 2147483647, %v254
  %vm265 = vcmp.eq.f32.partialorder %v264, 8.507059e+37
  %v266 = vand.u32 %v254, 2147483648
  %v267 = vor.u32 1.1754944e-38, %v266
  %v268 = vsel %vm265, %v267, %v263
  %v269 = vmul.f32 1.0, %v268
  %v270 = vtanh.pop %v250
  %v271 = vxor.u32 %v250, 2147483648
  %v272 = vmul.f32 %v271, 1.442695
  %v273 = vpow.pop %v272
  %v274 = vadd.f32 %v273, 1.0
  %v275 = vrcp.pop %v274
  %v276 = vmul.f32 %v274, %v275
  %v277 = vsub.f32 1.0, %v276
  %v278 = vmul.f32 %v275, %v277
  %v279 = vadd.f32 %v275, %v278
  %vm280 = vweird.f32 %v274
  %vm281 = vweird.f32 %v275
  %vm282 = vmor %vm280, %vm281
  %v283 = vsel %vm282, %v275, %v279
  %v284 = vand.u32 2147483647, %v274
  %vm285 = vcmp.eq.f32.partialorder %v284, 8.507059e+37
  %v286 = vand.u32 %v274, 2147483648
  %v287 = vor.u32 1.1754944e-38, %v286
  %v288 = vsel %vm285, %v287, %v283
  %v289 = vmul.f32 1.0, %v288
  %v290 = vmul.f32 %v269, 0.0
  %v291 = vmul.f32 %v269, %v270
  %293 = vrot.lane.b32.xlu0 %v291, 64
  %v294 = vpop.permute.xlu0 %293
  %v296 = vadd.f32 %v290, %v294
  %v297 = vtanh.pop %v296
  %v298 = vmul.f32 %v289, %v297
  %s299 = smul.u32 1, 2
  %s300 = smul.addr %s299, 8
  %s301 = scalar_lea.vmem [#allocation2], %s300
  %v302 = vld [vmem:[%s301] sm:$0xff]
  %v303 = vld [vmem:[%s301 + $0x8] sm:$0xff]
  %305 = vrot.lane.b32.xlu0 %v298, 64
  %v306 = vpop.permute.xlu0 %305
  %v307 = vsel %vm205, %v306, 0
  %309 = vmatpush.msra.mxu0 0.0
  %310 = vmatpush.msra.mxu0 0.0
  %311 = vmatpush.msra.mxu0 0.0
  %312 = vmatpush.msra.mxu0 0.0
  %313 = vmatpush.msra.mxu0 0.0
  %314 = vmatpush.msra.mxu0 0.0
  %315 = vmatpush.msra.mxu0 0.0
  %316 = vmatpush.msra.mxu0 0.0
  %317 = vmatpush.msra.mxu0 %v203
  %318 = vmatpush.msra.mxu0 %v201
  %319 = vmatpush.msra.mxu0 %v199
  %320 = vmatpush.msra.mxu0 %v197
  %321 = vmatpush.msra.mxu0 %v195
  %322 = vmatpush.msra.mxu0 %v193
  %323 = vmatpush.msra.mxu0 %v191
  %324 = vmatpush.msra.mxu0 %v189
  %325 = vmatmul.f32.gmra.mxu0 %v307
  %v326 = vpop.f32.mrf.mxu0
  %v327 = vadd.f32 0.0, %v326
  %328 = vdwg.mxu0
  %329 = vmatpush.msra.mxu0 0.0
  %330 = vmatpush.msra.mxu0 0.0
  %331 = vmatpush.msra.mxu0 0.0
  %332 = vmatpush.msra.mxu0 0.0
  %333 = vmatpush.msra.mxu0 0.0
  %334 = vmatpush.msra.mxu0 0.0
  %335 = vmatpush.msra.mxu0 0.0
  %336 = vmatpush.msra.mxu0 0.0
  %337 = vmatpush.msra.mxu0 %v204
  %338 = vmatpush.msra.mxu0 %v202
  %339 = vmatpush.msra.mxu0 %v200
  %340 = vmatpush.msra.mxu0 %v198
  %341 = vmatpush.msra.mxu0 %v196
  %342 = vmatpush.msra.mxu0 %v194
  %343 = vmatpush.msra.mxu0 %v192
  %344 = vmatpush.msra.mxu0 %v190
  %345 = vmatmul.f32.gmra.mxu0 %v307
  %v346 = vpop.f32.mrf.mxu0
  %v347 = vadd.f32 0.0, %v346
  %348 = vdwg.mxu0
  %v349 = vadd.f32 %v302, %v327
  %v350 = vadd.f32 %v303, %v347
  %v351 = vxor.u32 %v349, 2147483648
  %v352 = vmul.f32 %v351, 1.442695
  %v353 = vpow.pop %v352
  %v354 = vadd.f32 %v353, 1.0
  %v355 = vrcp.pop %v354
  %v356 = vmul.f32 %v354, %v355
  %v357 = vsub.f32 1.0, %v356
  %v358 = vmul.f32 %v355, %v357
  %v359 = vadd.f32 %v355, %v358
  %vm360 = vweird.f32 %v354
  %vm361 = vweird.f32 %v355
  %vm362 = vmor %vm360, %vm361
  %v363 = vsel %vm362, %v355, %v359
  %v364 = vand.u32 2147483647, %v354
  %vm365 = vcmp.eq.f32.partialorder %v364, 8.507059e+37
  %v366 = vand.u32 %v354, 2147483648
  %v367 = vor.u32 1.1754944e-38, %v366
  %v368 = vsel %vm365, %v367, %v363
  %v369 = vmul.f32 1.0, %v368
  %v370 = vtanh.pop %v350
  %v371 = vxor.u32 %v350, 2147483648
  %v372 = vmul.f32 %v371, 1.442695
  %v373 = vpow.pop %v372
  %v374 = vadd.f32 %v373, 1.0
  %v375 = vrcp.pop %v374
  %v376 = vmul.f32 %v374, %v375
  %v377 = vsub.f32 1.0, %v376
  %v378 = vmul.f32 %v375, %v377
  %v379 = vadd.f32 %v375, %v378
  %vm380 = vweird.f32 %v374
  %vm381 = vweird.f32 %v375
  %vm382 = vmor %vm380, %vm381
  %v383 = vsel %vm382, %v375, %v379
  %v384 = vand.u32 2147483647, %v374
  %vm385 = vcmp.eq.f32.partialorder %v384, 8.507059e+37
  %v386 = vand.u32 %v374, 2147483648
  %v387 = vor.u32 1.1754944e-38, %v386
  %v388 = vsel %vm385, %v387, %v383
  %v389 = vmul.f32 1.0, %v388
  %v390 = vmul.f32 %v369, %v296
  %v391 = vmul.f32 %v369, %v370
  %393 = vrot.lane.b32.xlu0 %v391, 64
  %v394 = vpop.permute.xlu0 %393
  %v396 = vadd.f32 %v390, %v394
  %v397 = vtanh.pop %v396
  %v398 = vmul.f32 %v389, %v397
  %s399 = smul.u32 2, 2
  %s400 = smul.addr %s399, 8
  %s401 = scalar_lea.vmem [#allocation2], %s400
  %v402 = vld [vmem:[%s401] sm:$0xff]
  %v403 = vld [vmem:[%s401 + $0x8] sm:$0xff]
  %405 = vrot.lane.b32.xlu0 %v398, 64
  %v406 = vpop.permute.xlu0 %405
  %v407 = vsel %vm205, %v406, 0
  %409 = vmatpush.msra.mxu0 0.0
  %410 = vmatpush.msra.mxu0 0.0
  %411 = vmatpush.msra.mxu0 0.0
  %412 = vmatpush.msra.mxu0 0.0
  %413 = vmatpush.msra.mxu0 0.0
  %414 = vmatpush.msra.mxu0 0.0
  %415 = vmatpush.msra.mxu0 0.0
  %416 = vmatpush.msra.mxu0 0.0
  %417 = vmatpush.msra.mxu0 %v203
  %418 = vmatpush.msra.mxu0 %v201
  %419 = vmatpush.msra.mxu0 %v199
  %420 = vmatpush.msra.mxu0 %v197
  %421 = vmatpush.msra.mxu0 %v195
  %422 = vmatpush.msra.mxu0 %v193
  %423 = vmatpush.msra.mxu0 %v191
  %424 = vmatpush.msra.mxu0 %v189
  %425 = vmatmul.f32.gmra.mxu0 %v407
  %v426 = vpop.f32.mrf.mxu0
  %v427 = vadd.f32 0.0, %v426
  %428 = vdwg.mxu0
  %429 = vmatpush.msra.mxu0 0.0
  %430 = vmatpush.msra.mxu0 0.0
  %431 = vmatpush.msra.mxu0 0.0
  %432 = vmatpush.msra.mxu0 0.0
  %433 = vmatpush.msra.mxu0 0.0
  %434 = vmatpush.msra.mxu0 0.0
  %435 = vmatpush.msra.mxu0 0.0
  %436 = vmatpush.msra.mxu0 0.0
  %437 = vmatpush.msra.mxu0 %v204
  %438 = vmatpush.msra.mxu0 %v202
  %439 = vmatpush.msra.mxu0 %v200
  %440 = vmatpush.msra.mxu0 %v198
  %441 = vmatpush.msra.mxu0 %v196
  %442 = vmatpush.msra.mxu0 %v194
  %443 = vmatpush.msra.mxu0 %v192
  %444 = vmatpush.msra.mxu0 %v190
  %445 = vmatmul.f32.gmra.mxu0 %v407
  %v446 = vpop.f32.mrf.mxu0
  %v447 = vadd.f32 0.0, %v446
  %448 = vdwg.mxu0
  %v449 = vadd.f32 %v402, %v427
  %v450 = vadd.f32 %v403, %v447
  %v451 = vxor.u32 %v449, 2147483648
  %v452 = vmul.f32 %v451, 1.442695
  %v453 = vpow.pop %v452
  %v454 = vadd.f32 %v453, 1.0
  %v455 = vrcp.pop %v454
  %v456 = vmul.f32 %v454, %v455
  %v457 = vsub.f32 1.0, %v456
  %v458 = vmul.f32 %v455, %v457
  %v459 = vadd.f32 %v455, %v458
  %vm460 = vweird.f32 %v454
  %vm461 = vweird.f32 %v455
  %vm462 = vmor %vm460, %vm461
  %v463 = vsel %vm462, %v455, %v459
  %v464 = vand.u32 2147483647, %v454
  %vm465 = vcmp.eq.f32.partialorder %v464, 8.507059e+37
  %v466 = vand.u32 %v454, 2147483648
  %v467 = vor.u32 1.1754944e-38, %v466
  %v468 = vsel %vm465, %v467, %v463
  %v469 = vmul.f32 1.0, %v468
  %v470 = vtanh.pop %v450
  %v471 = vxor.u32 %v450, 2147483648
  %v472 = vmul.f32 %v471, 1.442695
  %v473 = vpow.pop %v472
  %v474 = vadd.f32 %v473, 1.0
  %v475 = vrcp.pop %v474
  %v476 = vmul.f32 %v474, %v475
  %v477 = vsub.f32 1.0, %v476
  %v478 = vmul.f32 %v475, %v477
  %v479 = vadd.f32 %v475, %v478
  %vm480 = vweird.f32 %v474
  %vm481 = vweird.f32 %v475
  %vm482 = vmor %vm480, %vm481
  %v483 = vsel %vm482, %v475, %v479
  %v484 = vand.u32 2147483647, %v474
  %vm485 = vcmp.eq.f32.partialorder %v484, 8.507059e+37
  %v486 = vand.u32 %v474, 2147483648
  %v487 = vor.u32 1.1754944e-38, %v486
  %v488 = vsel %vm485, %v487, %v483
  %v489 = vmul.f32 1.0, %v488
  %v490 = vmul.f32 %v469, %v396
  %v491 = vmul.f32 %v469, %v470
  %493 = vrot.lane.b32.xlu0 %v491, 64
  %v494 = vpop.permute.xlu0 %493
  %v496 = vadd.f32 %v490, %v494
  %v497 = vtanh.pop %v496
  %v498 = vmul.f32 %v489, %v497
  %s499 = smul.u32 3, 2
  %s500 = smul.addr %s499, 8
  %s501 = scalar_lea.vmem [#allocation2], %s500
  %v502 = vld [vmem:[%s501] sm:$0xff]
  %v503 = vld [vmem:[%s501 + $0x8] sm:$0xff]
  %505 = vrot.lane.b32.xlu0 %v498, 64
  %v506 = vpop.permute.xlu0 %505
  %v507 = vsel %vm205, %v506, 0
  %509 = vmatpush.msra.mxu0 0.0
  %510 = vmatpush.msra.mxu0 0.0
  %511 = vmatpush.msra.mxu0 0.0
  %512 = vmatpush.msra.mxu0 0.0
  %513 = vmatpush.msra.mxu0 0.0
  %514 = vmatpush.msra.mxu0 0.0
  %515 = vmatpush.msra.mxu0 0.0
  %516 = vmatpush.msra.mxu0 0.0
  %517 = vmatpush.msra.mxu0 %v203
  %518 = vmatpush.msra.mxu0 %v201
  %519 = vmatpush.msra.mxu0 %v199
  %520 = vmatpush.msra.mxu0 %v197
  %521 = vmatpush.msra.mxu0 %v195
  %522 = vmatpush.msra.mxu0 %v193
  %523 = vmatpush.msra.mxu0 %v191
  %524 = vmatpush.msra.mxu0 %v189
  %525 = vmatmul.f32.gmra.mxu0 %v507
  %v526 = vpop.f32.mrf.mxu0
  %v527 = vadd.f32 0.0, %v526
  %528 = vdwg.mxu0
  %529 = vmatpush.msra.mxu0 0.0
  %530 = vmatpush.msra.mxu0 0.0
  %531 = vmatpush.msra.mxu0 0.0
  %532 = vmatpush.msra.mxu0 0.0
  %533 = vmatpush.msra.mxu0 0.0
  %534 = vmatpush.msra.mxu0 0.0
  %535 = vmatpush.msra.mxu0 0.0
  %536 = vmatpush.msra.mxu0 0.0
  %537 = vmatpush.msra.mxu0 %v204
  %538 = vmatpush.msra.mxu0 %v202
  %539 = vmatpush.msra.mxu0 %v200
  %540 = vmatpush.msra.mxu0 %v198
  %541 = vmatpush.msra.mxu0 %v196
  %542 = vmatpush.msra.mxu0 %v194
  %543 = vmatpush.msra.mxu0 %v192
  %544 = vmatpush.msra.mxu0 %v190
  %545 = vmatmul.f32.gmra.mxu0 %v507
  %v546 = vpop.f32.mrf.mxu0
  %v547 = vadd.f32 0.0, %v546
  %548 = vdwg.mxu0
  %v549 = vadd.f32 %v502, %v527
  %v550 = vadd.f32 %v503, %v547
  %v551 = vxor.u32 %v549, 2147483648
  %v552 = vmul.f32 %v551, 1.442695
  %v553 = vpow.pop %v552
  %v554 = vadd.f32 %v553, 1.0
  %v555 = vrcp.pop %v554
  %v556 = vmul.f32 %v554, %v555
  %v557 = vsub.f32 1.0, %v556
  %v558 = vmul.f32 %v555, %v557
  %v559 = vadd.f32 %v555, %v558
  %vm560 = vweird.f32 %v554
  %vm561 = vweird.f32 %v555
  %vm562 = vmor %vm560, %vm561
  %v563 = vsel %vm562, %v555, %v559
  %v564 = vand.u32 2147483647, %v554
  %vm565 = vcmp.eq.f32.partialorder %v564, 8.507059e+37
  %v566 = vand.u32 %v554, 2147483648
  %v567 = vor.u32 1.1754944e-38, %v566
  %v568 = vsel %vm565, %v567, %v563
  %v569 = vmul.f32 1.0, %v568
  %v570 = vtanh.pop %v550
  %v571 = vxor.u32 %v550, 2147483648
  %v572 = vmul.f32 %v571, 1.442695
  %v573 = vpow.pop %v572
  %v574 = vadd.f32 %v573, 1.0
  %v575 = vrcp.pop %v574
  %v576 = vmul.f32 %v574, %v575
  %v577 = vsub.f32 1.0, %v576
  %v578 = vmul.f32 %v575, %v577
  %v579 = vadd.f32 %v575, %v578
  %vm580 = vweird.f32 %v574
  %vm581 = vweird.f32 %v575
  %vm582 = vmor %vm580, %vm581
  %v583 = vsel %vm582, %v575, %v579
  %v584 = vand.u32 2147483647, %v574
  %vm585 = vcmp.eq.f32.partialorder %v584, 8.507059e+37
  %v586 = vand.u32 %v574, 2147483648
  %v587 = vor.u32 1.1754944e-38, %v586
  %v588 = vsel %vm585, %v587, %v583
  %v589 = vmul.f32 1.0, %v588
  %v590 = vmul.f32 %v569, %v496
  %v591 = vmul.f32 %v569, %v570
  %593 = vrot.lane.b32.xlu0 %v591, 64
  %v594 = vpop.permute.xlu0 %593
  %v596 = vadd.f32 %v590, %v594
  %v597 = vtanh.pop %v596
  %v598 = vmul.f32 %v589, %v597
  %s599 = smul.u32 4, 2
  %s600 = smul.addr %s599, 8
  %s601 = scalar_lea.vmem [#allocation2], %s600
  %v602 = vld [vmem:[%s601] sm:$0xff]
  %v603 = vld [vmem:[%s601 + $0x8] sm:$0xff]
  %605 = vrot.lane.b32.xlu0 %v598, 64
  %v606 = vpop.permute.xlu0 %605
  %v607 = vsel %vm205, %v606, 0
  %609 = vmatpush.msra.mxu0 0.0
  %610 = vmatpush.msra.mxu0 0.0
  %611 = vmatpush.msra.mxu0 0.0
  %612 = vmatpush.msra.mxu0 0.0
  %613 = vmatpush.msra.mxu0 0.0
  %614 = vmatpush.msra.mxu0 0.0
  %615 = vmatpush.msra.mxu0 0.0
  %616 = vmatpush.msra.mxu0 0.0
  %617 = vmatpush.msra.mxu0 %v203
  %618 = vmatpush.msra.mxu0 %v201
  %619 = vmatpush.msra.mxu0 %v199
  %620 = vmatpush.msra.mxu0 %v197
  %621 = vmatpush.msra.mxu0 %v195
  %622 = vmatpush.msra.mxu0 %v193
  %623 = vmatpush.msra.mxu0 %v191
  %624 = vmatpush.msra.mxu0 %v189
  %625 = vmatmul.f32.gmra.mxu0 %v607
  %v626 = vpop.f32.mrf.mxu0
  %v627 = vadd.f32 0.0, %v626
  %628 = vdwg.mxu0
  %629 = vmatpush.msra.mxu0 0.0
  %630 = vmatpush.msra.mxu0 0.0
  %631 = vmatpush.msra.mxu0 0.0
  %632 = vmatpush.msra.mxu0 0.0
  %633 = vmatpush.msra.mxu0 0.0
  %634 = vmatpush.msra.mxu0 0.0
  %635 = vmatpush.msra.mxu0 0.0
  %636 = vmatpush.msra.mxu0 0.0
  %637 = vmatpush.msra.mxu0 %v204
  %638 = vmatpush.msra.mxu0 %v202
  %639 = vmatpush.msra.mxu0 %v200
  %640 = vmatpush.msra.mxu0 %v198
  %641 = vmatpush.msra.mxu0 %v196
  %642 = vmatpush.msra.mxu0 %v194
  %643 = vmatpush.msra.mxu0 %v192
  %644 = vmatpush.msra.mxu0 %v190
  %645 = vmatmul.f32.gmra.mxu0 %v607
  %v646 = vpop.f32.mrf.mxu0
  %v647 = vadd.f32 0.0, %v646
  %648 = vdwg.mxu0
  %v649 = vadd.f32 %v602, %v627
  %v650 = vadd.f32 %v603, %v647
  %v651 = vxor.u32 %v649, 2147483648
  %v652 = vmul.f32 %v651, 1.442695
  %v653 = vpow.pop %v652
  %v654 = vadd.f32 %v653, 1.0
  %v655 = vrcp.pop %v654
  %v656 = vmul.f32 %v654, %v655
  %v657 = vsub.f32 1.0, %v656
  %v658 = vmul.f32 %v655, %v657
  %v659 = vadd.f32 %v655, %v658
  %vm660 = vweird.f32 %v654
  %vm661 = vweird.f32 %v655
  %vm662 = vmor %vm660, %vm661
  %v663 = vsel %vm662, %v655, %v659
  %v664 = vand.u32 2147483647, %v654
  %vm665 = vcmp.eq.f32.partialorder %v664, 8.507059e+37
  %v666 = vand.u32 %v654, 2147483648
  %v667 = vor.u32 1.1754944e-38, %v666
  %v668 = vsel %vm665, %v667, %v663
  %v669 = vmul.f32 1.0, %v668
  %v670 = vtanh.pop %v650
  %v671 = vxor.u32 %v650, 2147483648
  %v672 = vmul.f32 %v671, 1.442695
  %v673 = vpow.pop %v672
  %v674 = vadd.f32 %v673, 1.0
  %v675 = vrcp.pop %v674
  %v676 = vmul.f32 %v674, %v675
  %v677 = vsub.f32 1.0, %v676
  %v678 = vmul.f32 %v675, %v677
  %v679 = vadd.f32 %v675, %v678
  %vm680 = vweird.f32 %v674
  %vm681 = vweird.f32 %v675
  %vm682 = vmor %vm680, %vm681
  %v683 = vsel %vm682, %v675, %v679
  %v684 = vand.u32 2147483647, %v674
  %vm685 = vcmp.eq.f32.partialorder %v684, 8.507059e+37
  %v686 = vand.u32 %v674, 2147483648
  %v687 = vor.u32 1.1754944e-38, %v686
  %v688 = vsel %vm685, %v687, %v683
  %v689 = vmul.f32 1.0, %v688
  %v690 = vmul.f32 %v669, %v596
  %v691 = vmul.f32 %v669, %v670
  %693 = vrot.lane.b32.xlu0 %v691, 64
  %v694 = vpop.permute.xlu0 %693
  %v696 = vadd.f32 %v690, %v694
  %v697 = vtanh.pop %v696
  %v698 = vmul.f32 %v689, %v697
  %s699 = smul.u32 5, 2
  %s700 = smul.addr %s699, 8
  %s701 = scalar_lea.vmem [#allocation2], %s700
  %v702 = vld [vmem:[%s701] sm:$0xff]
  %v703 = vld [vmem:[%s701 + $0x8] sm:$0xff]
  %705 = vrot.lane.b32.xlu0 %v698, 64
  %v706 = vpop.permute.xlu0 %705
  %v707 = vsel %vm205, %v706, 0
  %709 = vmatpush.msra.mxu0 0.0
  %710 = vmatpush.msra.mxu0 0.0
  %711 = vmatpush.msra.mxu0 0.0
  %712 = vmatpush.msra.mxu0 0.0
  %713 = vmatpush.msra.mxu0 0.0
  %714 = vmatpush.msra.mxu0 0.0
  %715 = vmatpush.msra.mxu0 0.0
  %716 = vmatpush.msra.mxu0 0.0
  %717 = vmatpush.msra.mxu0 %v203
  %718 = vmatpush.msra.mxu0 %v201
  %719 = vmatpush.msra.mxu0 %v199
  %720 = vmatpush.msra.mxu0 %v197
  %721 = vmatpush.msra.mxu0 %v195
  %722 = vmatpush.msra.mxu0 %v193
  %723 = vmatpush.msra.mxu0 %v191
  %724 = vmatpush.msra.mxu0 %v189
  %725 = vmatmul.f32.gmra.mxu0 %v707
  %v726 = vpop.f32.mrf.mxu0
  %v727 = vadd.f32 0.0, %v726
  %728 = vdwg.mxu0
  %729 = vmatpush.msra.mxu0 0.0
  %730 = vmatpush.msra.mxu0 0.0
  %731 = vmatpush.msra.mxu0 0.0
  %732 = vmatpush.msra.mxu0 0.0
  %733 = vmatpush.msra.mxu0 0.0
  %734 = vmatpush.msra.mxu0 0.0
  %735 = vmatpush.msra.mxu0 0.0
  %736 = vmatpush.msra.mxu0 0.0
  %737 = vmatpush.msra.mxu0 %v204
  %738 = vmatpush.msra.mxu0 %v202
  %739 = vmatpush.msra.mxu0 %v200
  %740 = vmatpush.msra.mxu0 %v198
  %741 = vmatpush.msra.mxu0 %v196
  %742 = vmatpush.msra.mxu0 %v194
  %743 = vmatpush.msra.mxu0 %v192
  %744 = vmatpush.msra.mxu0 %v190
  %745 = vmatmul.f32.gmra.mxu0 %v707
  %v746 = vpop.f32.mrf.mxu0
  %v747 = vadd.f32 0.0, %v746
  %748 = vdwg.mxu0
  %v749 = vadd.f32 %v702, %v727
  %v750 = vadd.f32 %v703, %v747
  %v751 = vxor.u32 %v749, 2147483648
  %v752 = vmul.f32 %v751, 1.442695
  %v753 = vpow.pop %v752
  %v754 = vadd.f32 %v753, 1.0
  %v755 = vrcp.pop %v754
  %v756 = vmul.f32 %v754, %v755
  %v757 = vsub.f32 1.0, %v756
  %v758 = vmul.f32 %v755, %v757
  %v759 = vadd.f32 %v755, %v758
  %vm760 = vweird.f32 %v754
  %vm761 = vweird.f32 %v755
  %vm762 = vmor %vm760, %vm761
  %v763 = vsel %vm762, %v755, %v759
  %v764 = vand.u32 2147483647, %v754
  %vm765 = vcmp.eq.f32.partialorder %v764, 8.507059e+37
  %v766 = vand.u32 %v754, 2147483648
  %v767 = vor.u32 1.1754944e-38, %v766
  %v768 = vsel %vm765, %v767, %v763
  %v769 = vmul.f32 1.0, %v768
  %v770 = vtanh.pop %v750
  %v771 = vxor.u32 %v750, 2147483648
  %v772 = vmul.f32 %v771, 1.442695
  %v773 = vpow.pop %v772
  %v774 = vadd.f32 %v773, 1.0
  %v775 = vrcp.pop %v774
  %v776 = vmul.f32 %v774, %v775
  %v777 = vsub.f32 1.0, %v776
  %v778 = vmul.f32 %v775, %v777
  %v779 = vadd.f32 %v775, %v778
  %vm780 = vweird.f32 %v774
  %vm781 = vweird.f32 %v775
  %vm782 = vmor %vm780, %vm781
  %v783 = vsel %vm782, %v775, %v779
  %v784 = vand.u32 2147483647, %v774
  %vm785 = vcmp.eq.f32.partialorder %v784, 8.507059e+37
  %v786 = vand.u32 %v774, 2147483648
  %v787 = vor.u32 1.1754944e-38, %v786
  %v788 = vsel %vm785, %v787, %v783
  %v789 = vmul.f32 1.0, %v788
  %v790 = vmul.f32 %v769, %v696
  %v791 = vmul.f32 %v769, %v770
  %793 = vrot.lane.b32.xlu0 %v791, 64
  %v794 = vpop.permute.xlu0 %793
  %v796 = vadd.f32 %v790, %v794
  %v797 = vtanh.pop %v796
  %v798 = vmul.f32 %v789, %v797
  %s799 = smul.u32 6, 2
  %s800 = smul.addr %s799, 8
  %s801 = scalar_lea.vmem [#allocation2], %s800
  %v802 = vld [vmem:[%s801] sm:$0xff]
  %v803 = vld [vmem:[%s801 + $0x8] sm:$0xff]
  %805 = vrot.lane.b32.xlu0 %v798, 64
  %v806 = vpop.permute.xlu0 %805
  %v807 = vsel %vm205, %v806, 0
  %809 = vmatpush.msra.mxu0 0.0
  %810 = vmatpush.msra.mxu0 0.0
  %811 = vmatpush.msra.mxu0 0.0
  %812 = vmatpush.msra.mxu0 0.0
  %813 = vmatpush.msra.mxu0 0.0
  %814 = vmatpush.msra.mxu0 0.0
  %815 = vmatpush.msra.mxu0 0.0
  %816 = vmatpush.msra.mxu0 0.0
  %817 = vmatpush.msra.mxu0 %v203
  %818 = vmatpush.msra.mxu0 %v201
  %819 = vmatpush.msra.mxu0 %v199
  %820 = vmatpush.msra.mxu0 %v197
  %821 = vmatpush.msra.mxu0 %v195
  %822 = vmatpush.msra.mxu0 %v193
  %823 = vmatpush.msra.mxu0 %v191
  %824 = vmatpush.msra.mxu0 %v189
  %825 = vmatmul.f32.gmra.mxu0 %v807
  %v826 = vpop.f32.mrf.mxu0
  %v827 = vadd.f32 0.0, %v826
  %828 = vdwg.mxu0
  %829 = vmatpush.msra.mxu0 0.0
  %830 = vmatpush.msra.mxu0 0.0
  %831 = vmatpush.msra.mxu0 0.0
  %832 = vmatpush.msra.mxu0 0.0
  %833 = vmatpush.msra.mxu0 0.0
  %834 = vmatpush.msra.mxu0 0.0
  %835 = vmatpush.msra.mxu0 0.0
  %836 = vmatpush.msra.mxu0 0.0
  %837 = vmatpush.msra.mxu0 %v204
  %838 = vmatpush.msra.mxu0 %v202
  %839 = vmatpush.msra.mxu0 %v200
  %840 = vmatpush.msra.mxu0 %v198
  %841 = vmatpush.msra.mxu0 %v196
  %842 = vmatpush.msra.mxu0 %v194
  %843 = vmatpush.msra.mxu0 %v192
  %844 = vmatpush.msra.mxu0 %v190
  %845 = vmatmul.f32.gmra.mxu0 %v807
  %v846 = vpop.f32.mrf.mxu0
  %v847 = vadd.f32 0.0, %v846
  %848 = vdwg.mxu0
  %v849 = vadd.f32 %v802, %v827
  %v850 = vadd.f32 %v803, %v847
  %v851 = vxor.u32 %v849, 2147483648
  %v852 = vmul.f32 %v851, 1.442695
  %v853 = vpow.pop %v852
  %v854 = vadd.f32 %v853, 1.0
  %v855 = vrcp.pop %v854
  %v856 = vmul.f32 %v854, %v855
  %v857 = vsub.f32 1.0, %v856
  %v858 = vmul.f32 %v855, %v857
  %v859 = vadd.f32 %v855, %v858
  %vm860 = vweird.f32 %v854
  %vm861 = vweird.f32 %v855
  %vm862 = vmor %vm860, %vm861
  %v863 = vsel %vm862, %v855, %v859
  %v864 = vand.u32 2147483647, %v854
  %vm865 = vcmp.eq.f32.partialorder %v864, 8.507059e+37
  %v866 = vand.u32 %v854, 2147483648
  %v867 = vor.u32 1.1754944e-38, %v866
  %v868 = vsel %vm865, %v867, %v863
  %v869 = vmul.f32 1.0, %v868
  %v870 = vtanh.pop %v850
  %v871 = vxor.u32 %v850, 2147483648
  %v872 = vmul.f32 %v871, 1.442695
  %v873 = vpow.pop %v872
  %v874 = vadd.f32 %v873, 1.0
  %v875 = vrcp.pop %v874
  %v876 = vmul.f32 %v874, %v875
  %v877 = vsub.f32 1.0, %v876
  %v878 = vmul.f32 %v875, %v877
  %v879 = vadd.f32 %v875, %v878
  %vm880 = vweird.f32 %v874
  %vm881 = vweird.f32 %v875
  %vm882 = vmor %vm880, %vm881
  %v883 = vsel %vm882, %v875, %v879
  %v884 = vand.u32 2147483647, %v874
  %vm885 = vcmp.eq.f32.partialorder %v884, 8.507059e+37
  %v886 = vand.u32 %v874, 2147483648
  %v887 = vor.u32 1.1754944e-38, %v886
  %v888 = vsel %vm885, %v887, %v883
  %v889 = vmul.f32 1.0, %v888
  %v890 = vmul.f32 %v869, %v796
  %v891 = vmul.f32 %v869, %v870
  %893 = vrot.lane.b32.xlu0 %v891, 64
  %v894 = vpop.permute.xlu0 %893
  %v896 = vadd.f32 %v890, %v894
  %v897 = vtanh.pop %v896
  %v898 = vmul.f32 %v889, %v897
  %s899 = smul.u32 7, 2
  %s900 = smul.addr %s899, 8
  %s901 = scalar_lea.vmem [#allocation2], %s900
  %v902 = vld [vmem:[%s901] sm:$0xff]
  %v903 = vld [vmem:[%s901 + $0x8] sm:$0xff]
  %905 = vrot.lane.b32.xlu0 %v898, 64
  %v906 = vpop.permute.xlu0 %905
  %v907 = vsel %vm205, %v906, 0
  %909 = vmatpush.msra.mxu0 0.0
  %910 = vmatpush.msra.mxu0 0.0
  %911 = vmatpush.msra.mxu0 0.0
  %912 = vmatpush.msra.mxu0 0.0
  %913 = vmatpush.msra.mxu0 0.0
  %914 = vmatpush.msra.mxu0 0.0
  %915 = vmatpush.msra.mxu0 0.0
  %916 = vmatpush.msra.mxu0 0.0
  %917 = vmatpush.msra.mxu0 %v203
  %918 = vmatpush.msra.mxu0 %v201
  %919 = vmatpush.msra.mxu0 %v199
  %920 = vmatpush.msra.mxu0 %v197
  %921 = vmatpush.msra.mxu0 %v195
  %922 = vmatpush.msra.mxu0 %v193
  %923 = vmatpush.msra.mxu0 %v191
  %924 = vmatpush.msra.mxu0 %v189
  %925 = vmatmul.f32.gmra.mxu0 %v907
  %v926 = vpop.f32.mrf.mxu0
  %v927 = vadd.f32 0.0, %v926
  %928 = vdwg.mxu0
  %929 = vmatpush.msra.mxu0 0.0
  %930 = vmatpush.msra.mxu0 0.0
  %931 = vmatpush.msra.mxu0 0.0
  %932 = vmatpush.msra.mxu0 0.0
  %933 = vmatpush.msra.mxu0 0.0
  %934 = vmatpush.msra.mxu0 0.0
  %935 = vmatpush.msra.mxu0 0.0
  %936 = vmatpush.msra.mxu0 0.0
  %937 = vmatpush.msra.mxu0 %v204
  %938 = vmatpush.msra.mxu0 %v202
  %939 = vmatpush.msra.mxu0 %v200
  %940 = vmatpush.msra.mxu0 %v198
  %941 = vmatpush.msra.mxu0 %v196
  %942 = vmatpush.msra.mxu0 %v194
  %943 = vmatpush.msra.mxu0 %v192
  %944 = vmatpush.msra.mxu0 %v190
  %945 = vmatmul.f32.gmra.mxu0 %v907
  %v946 = vpop.f32.mrf.mxu0
  %v947 = vadd.f32 0.0, %v946
  %948 = vdwg.mxu0
  %v949 = vadd.f32 %v902, %v927
  %v950 = vadd.f32 %v903, %v947
  %v951 = vxor.u32 %v949, 2147483648
  %v952 = vmul.f32 %v951, 1.442695
  %v953 = vpow.pop %v952
  %v954 = vadd.f32 %v953, 1.0
  %v955 = vrcp.pop %v954
  %v956 = vmul.f32 %v954, %v955
  %v957 = vsub.f32 1.0, %v956
  %v958 = vmul.f32 %v955, %v957
  %v959 = vadd.f32 %v955, %v958
  %vm960 = vweird.f32 %v954
  %vm961 = vweird.f32 %v955
  %vm962 = vmor %vm960, %vm961
  %v963 = vsel %vm962, %v955, %v959
  %v964 = vand.u32 2147483647, %v954
  %vm965 = vcmp.eq.f32.partialorder %v964, 8.507059e+37
  %v966 = vand.u32 %v954, 2147483648
  %v967 = vor.u32 1.1754944e-38, %v966
  %v968 = vsel %vm965, %v967, %v963
  %v969 = vmul.f32 1.0, %v968
  %v970 = vtanh.pop %v950
  %v971 = vxor.u32 %v950, 2147483648
  %v972 = vmul.f32 %v971, 1.442695
  %v973 = vpow.pop %v972
  %v974 = vadd.f32 %v973, 1.0
  %v975 = vrcp.pop %v974
  %v976 = vmul.f32 %v974, %v975
  %v977 = vsub.f32 1.0, %v976
  %v978 = vmul.f32 %v975, %v977
  %v979 = vadd.f32 %v975, %v978
  %vm980 = vweird.f32 %v974
  %vm981 = vweird.f32 %v975
  %vm982 = vmor %vm980, %vm981
  %v983 = vsel %vm982, %v975, %v979
  %v984 = vand.u32 2147483647, %v974
  %vm985 = vcmp.eq.f32.partialorder %v984, 8.507059e+37
  %v986 = vand.u32 %v974, 2147483648
  %v987 = vor.u32 1.1754944e-38, %v986
  %v988 = vsel %vm985, %v987, %v983
  %v989 = vmul.f32 1.0, %v988
  %v990 = vmul.f32 %v969, %v896
  %v991 = vmul.f32 %v969, %v970
  %993 = vrot.lane.b32.xlu0 %v991, 64
  %v994 = vpop.permute.xlu0 %993
  %v996 = vadd.f32 %v990, %v994
  %v997 = vtanh.pop %v996
  %v998 = vmul.f32 %v989, %v997
  %v999 = vld [vmem:[%s5] sm:$0xff]
  %v1000 = vld [vmem:[%s5 + $0x8] sm:$0xff]
  %v1001 = vld [vmem:[%s5 + $0x10] sm:$0xff]
  %v1002 = vld [vmem:[%s5 + $0x18] sm:$0xff]
  %v1003 = vld [vmem:[%s5 + $0x20] sm:$0xff]
  %v1004 = vld [vmem:[%s5 + $0x28] sm:$0xff]
  %v1005 = vld [vmem:[%s5 + $0x30] sm:$0xff]
  %v1006 = vld [vmem:[%s5 + $0x38] sm:$0xff]
  %v1007 = vld [vmem:[%s4] sm:$0xff]
  %v1008 = vld [vmem:[%s6] sm:$0x1]
  %1010 = vset.pattern.permute.xlu0 0
  %1011 = vperm.xlu0 %1010, %v1007
  %v1012 = vpop.permute.xlu0 %1011
  %v1015 = vperm.slane %v1008, 0
  %v1017 = vmul.f32 %v1012, %v1015
  %1019 = vrot.lane.b32.xlu0 %v998, 64
  %v1020 = vpop.permute.xlu0 %1019
  %v1021 = vsel %vm205, %v1020, 0
  %1023 = vmatpush.msra.mxu0 0.0
  %1024 = vmatpush.msra.mxu0 0.0
  %1025 = vmatpush.msra.mxu0 0.0
  %1026 = vmatpush.msra.mxu0 0.0
  %1027 = vmatpush.msra.mxu0 0.0
  %1028 = vmatpush.msra.mxu0 0.0
  %1029 = vmatpush.msra.mxu0 0.0
  %1030 = vmatpush.msra.mxu0 0.0
  %1031 = vmatpush.msra.mxu0 %v1006
  %1032 = vmatpush.msra.mxu0 %v1005
  %1033 = vmatpush.msra.mxu0 %v1004
  %1034 = vmatpush.msra.mxu0 %v1003
  %1035 = vmatpush.msra.mxu0 %v1002
  %1036 = vmatpush.msra.mxu0 %v1001
  %1037 = vmatpush.msra.mxu0 %v1000
  %1038 = vmatpush.msra.mxu0 %v999
  %1039 = vmatmul.f32.gmra.mxu0 %v1021
  %v1040 = vpop.f32.mrf.mxu0
  %v1041 = vadd.f32 %v1017, %v1040
  %1042 = vdwg.mxu0
  %v1043 = vld [vmem:[%s7] sm:$0x1]
  %v1045 = vperm.slane %v1043, 0
  %v1047 = vadd.f32 %v1041, %v1045
  %v1048 = vmax.f32 %v1047, 0.0
  %v1049 = vld [vmem:[%s8] sm:$0x1]
  %v1051 = vperm.slane %v1049, 0
  %v1053 = vmul.f32 %v1048, %v1051
  %vm1054 = vcmask 261120
  %v1055 = vsel %vm1054, %v1053, 0.0
  %1056 = vadd.xlane.f32.xlu0 %v1055
  %v1057 = vpop.xlane.xlu0 %1056
  %v1058 = vld [vmem:[#allocation3] sm:$0x1]
  %v1060 = vperm.slane %v1058, 0
  %v1062 = vadd.f32 %v1057, %v1060
  %vm1063 = vcmask 7168
  %1064 = vst.msk [vmem:[%s10] sm:$0xff] %vm1063, %v1062
  // Predicated region
  $region42: #{lstm_forward.1} parent=0 // pred_check
    _
  $region43: #{lstm_forward.1} parent=0 // pred_check_branch
    %1066 = sbr.rel (0) target = $region45
  $region44: #{lstm_forward.1} parent=0 // pred_region
    _
  $region45: #{lstm_forward.1} parent=0 // pred_fallthru
    _
  // Predicated region
  $region46: #{lstm_forward.1} parent=0 // pred_check
    _
  $region47: #{lstm_forward.1} parent=0 // pred_check_branch
    %1068 = sbr.rel (0) target = $region49
  $region48: #{lstm_forward.1} parent=0 // pred_region
    _
  $region49: #{lstm_forward.1} parent=0 // pred_fallthru
    _

</llo_original>
